<compile_context>
chip_gen: v7x
topology: tpu7x:2x2x1
jax: 0.10.0
libtpu: 0.0.40
codegen_flags: <defaults>
</compile_context>

<pallas_src>
import functools

import jax
import jax.numpy as jnp
import numpy as np
from jax.experimental import pallas as pl
from jax.experimental.pallas import tpu as pltpu


# --------------------------------- kernel -----------------------------------

def _rtab_kernel(B, H, W, Cin, Cout, Cmid, k,
                 x_ref, shift_ref, w1_ref, b1_ref, w2_ref, b2_ref,
                 pool_ref, wd_ref, bd_ref, wu_ref, bu_ref, out_ref):
    p = k // 2
    BH = B * H
    WCo = W * Cout

    x_fold = x_ref[...]                                  # (B, H, W*Cin) f32
    x_flat = x_fold.reshape(BH, W * Cin)                 # merge leading dims only
    xb = x_flat.astype(jnp.bfloat16)                     # bf16 MXU operand

    def conv_same(inp_b, w_ref, b_ref):
        """k x k 'same' conv on width-folded data (BH, W*C) -> (BH, W*Cout) f32.

        Horizontal taps + left/right zero halo live in the banded weight (one
        (W*C, W*Cout) matrix per kernel row); vertical taps + top/bottom and
        cross-image halo are 0/1 row-shift matmuls.  Pure MXU: no concats,
        no unaligned slices, no masks.
        """
        acc = jnp.dot(inp_b, w_ref[p], preferred_element_type=jnp.float32)
        for di in range(-p, p + 1):
            if di == 0:
                continue
            xs = jnp.dot(shift_ref[di + p], inp_b,
                         preferred_element_type=jnp.float32).astype(jnp.bfloat16)
            acc += jnp.dot(xs, w_ref[di + p],
                           preferred_element_type=jnp.float32)
        return acc + b_ref[...]

    # conv2d_1 + ReLU, then conv2d_2 (biases already width-tiled)
    h1 = jnp.maximum(conv_same(xb, w1_ref, b1_ref), 0.0)          # (BH, WCo) f32
    h2 = conv_same(h1.astype(jnp.bfloat16), w2_ref, b2_ref)       # (BH, WCo) f32

    # ---- temporal attention: GAP (one MXU matmul carrying 1/(H*W)) ->
    #      1x1 down -> ReLU -> 1x1 up -> sigmoid.  Tiny; kept in f32. ----
    pooled = jnp.dot(pool_ref[...], h2,
                     preferred_element_type=jnp.float32)          # (B, WCo)
    d = jnp.maximum(jnp.dot(pooled, wd_ref[...],
                            preferred_element_type=jnp.float32)
                    + bd_ref[...], 0.0)                           # (B, Cmid)
    u = jnp.dot(d, wu_ref[...],
                preferred_element_type=jnp.float32) + bu_ref[...] # (B, WCo)
    scale = jax.nn.sigmoid(u)

    # ---- scale + residual, lane-dense, single unmasked store ----
    out = h2.reshape(B, H, WCo) * scale[:, None, :] + x_fold
    out_ref[...] = out.astype(out_ref.dtype)


# ------------------------------- wrapper -------------------------------------

def _fold_conv_weight_banded(w_hwio, W):
    """(k, k, Cin, Cout) HWIO -> (k, W*Cin, W*Cout) banded folded weights.

    mats[ki][(w+dj)*Cin + ci, w*Cout + co] = w_hwio[ki, kj, ci, co], dj = kj - p.
    Left/right zero padding is implicit (off-band entries are zero)."""
    k = w_hwio.shape[0]
    p = k // 2
    mats = []
    for ki in range(k):
        m = jnp.zeros((W * w_hwio.shape[2], W * w_hwio.shape[3]), w_hwio.dtype)
        for kj in range(k):
            dj = kj - p
            m = m + jnp.kron(jnp.eye(W, k=-dj, dtype=w_hwio.dtype),
                             w_hwio[ki, kj])
        mats.append(m)
    return jnp.stack(mats, axis=0)


def _make_shift_stack(B, H, k, dtype):
    """(k, B*H, B*H) 0/1 row-shift matrices: (S_di @ X)[r] = X[r+di] within an
    image, 0 at top/bottom/image boundaries (index p is the identity)."""
    p = k // 2
    eye_b = jnp.eye(B, dtype=jnp.float32)
    mats = [jnp.kron(eye_b, jnp.eye(H, k=di, dtype=jnp.float32))
            for di in range(-p, p + 1)]
    return jnp.stack(mats, axis=0).astype(dtype)


def _choose_batch_block(N, H):
    """Target B*H >= 256 rows (MXU fill); keep grid >= 2 for v7x megacore
    when that still leaves >= 128 rows."""
    divs = [d for d in range(1, N + 1) if N % d == 0]
    reach = [d for d in divs if d * H >= 256]
    B = min(reach) if reach else max(divs)
    if N // B < 2:
        alt = [d for d in divs if N // d >= 2 and d * H >= 128]
        if alt:
            B = max(alt)
    return B


def rtab_forward(x_nchw, params, k, batch_block=None):
    """x_nchw: (N, C, H, W) float32, PyTorch layout.  Returns (N, C, H, W)."""
    w1, b1, w2, b2, wd, bd, wu, bu = params
    N, Cin, H, W = x_nchw.shape
    Cout = w1.shape[-1]
    Cmid = wd.shape[-1]
    assert Cin == Cout, "residual add requires in_channels == out_channels"
    WCi, WCo = W * Cin, W * Cout

    B = _choose_batch_block(N, H) if batch_block is None else batch_block
    assert N % B == 0
    BH = B * H

    # NCHW -> width-folded (N, H, W*C), lane-dense.
    x_fold = jnp.transpose(x_nchw, (0, 2, 3, 1)).reshape(N, H, WCi)
    x_fold = x_fold.astype(jnp.float32)

    # Pre-expanded (folded-layout) parameters; MXU operands in bf16.
    shift = _make_shift_stack(B, H, k, jnp.bfloat16)            # (k, BH, BH)
    w1_big = _fold_conv_weight_banded(w1, W).astype(jnp.bfloat16)   # (k, WCi, WCo)
    w2_big = _fold_conv_weight_banded(w2, W).astype(jnp.bfloat16)   # (k, WCo, WCo)
    b1_w = jnp.tile(b1.reshape(1, Cout), (1, W)).astype(jnp.float32)
    b2_w = jnp.tile(b2.reshape(1, Cout), (1, W)).astype(jnp.float32)
    pool = (jnp.kron(jnp.eye(B, dtype=jnp.float32),
                     jnp.ones((1, H), jnp.float32)) / float(H * W))  # (B, BH)
    wd_eff = jnp.tile(wd, (W, 1)).astype(jnp.float32)           # (W*Cout, Cmid)
    bd_2d = bd.reshape(1, Cmid).astype(jnp.float32)
    wu_w = jnp.tile(wu, (1, W)).astype(jnp.float32)             # (Cmid, W*Cout)
    bu_w = jnp.tile(bu.reshape(1, Cout), (1, W)).astype(jnp.float32)

    kernel = functools.partial(_rtab_kernel, B, H, W, Cin, Cout, Cmid, k)

    # Advisory cost estimate for the whole call.
    nblk = N // B
    conv_flops_blk = ((k * 2 * BH * WCi * WCo + (k - 1) * 2 * BH * BH * WCi)
                      + (k * 2 * BH * WCo * WCo + (k - 1) * 2 * BH * BH * WCo))
    attn_flops_blk = 2 * B * BH * WCo + 4 * B * WCo * Cmid
    cost = pl.CostEstimate(
        flops=int(nblk * (conv_flops_blk + attn_flops_blk) + 3 * N * H * WCo),
        transcendentals=int(N * WCo),
        bytes_accessed=int(N * H * WCi * 4 + N * H * WCo * 4
                           + (w1_big.size + w2_big.size + shift.size) * 2
                           + (b1_w.size + b2_w.size + pool.size + wd_eff.size
                              + bd_2d.size + wu_w.size + bu_w.size) * 4))

    out_fold = pl.pallas_call(
        kernel,
        out_shape=jax.ShapeDtypeStruct((N, H, WCo), jnp.float32),
        grid_spec=pltpu.PrefetchScalarGridSpec(
            num_scalar_prefetch=0,
            grid=(N // B,),
            in_specs=[
                pl.BlockSpec((B, H, WCi), lambda n: (n, 0, 0)),
                pl.BlockSpec((k, BH, BH), lambda n: (0, 0, 0)),
                pl.BlockSpec((k, WCi, WCo), lambda n: (0, 0, 0)),
                pl.BlockSpec((1, WCo), lambda n: (0, 0)),
                pl.BlockSpec((k, WCo, WCo), lambda n: (0, 0, 0)),
                pl.BlockSpec((1, WCo), lambda n: (0, 0)),
                pl.BlockSpec((B, BH), lambda n: (0, 0)),
                pl.BlockSpec((WCo, Cmid), lambda n: (0, 0)),
                pl.BlockSpec((1, Cmid), lambda n: (0, 0)),
                pl.BlockSpec((Cmid, WCo), lambda n: (0, 0)),
                pl.BlockSpec((1, WCo), lambda n: (0, 0)),
            ],
            out_specs=pl.BlockSpec((B, H, WCo), lambda n: (n, 0, 0)),
        ),
        compiler_params=pltpu.CompilerParams(
            dimension_semantics=("parallel",),
            vmem_limit_bytes=32 * 1024 * 1024),
        cost_estimate=cost,
    )(x_fold, shift, w1_big, b1_w, w2_big, b2_w,
      pool, wd_eff, bd_2d, wu_w, bu_w)

    out = out_fold.reshape(N, H, W, Cout)
    return jnp.transpose(out, (0, 3, 1, 2))


# ------------------- parameter construction (weight norm) -------------------

def _weightnorm_conv_params(key, cin, cout, k):
    """PyTorch weight_norm(Conv2d): w = g * v / ||v|| (norm over all dims but 0).
    Returns HWIO weight (k,k,cin,cout) and bias (cout,)."""
    kv, kg, kb = jax.random.split(key, 3)
    v = jax.random.normal(kv, (cout, cin, k, k), jnp.float32) * 0.1
    g = jax.random.uniform(kg, (cout,), jnp.float32, 0.5, 1.5)
    b = jax.random.normal(kb, (cout,), jnp.float32) * 0.05
    norm = jnp.sqrt(jnp.sum(v * v, axis=(1, 2, 3), keepdims=True))
    w_oihw = g[:, None, None, None] * v / norm
    w_hwio = jnp.transpose(w_oihw, (2, 3, 1, 0))        # (k, k, cin, cout)
    return w_hwio, b


def make_rtab_params(key, in_channels, out_channels, k, r):
    k1, k2, k3, k4 = jax.random.split(key, 4)
    cmid = out_channels // r
    w1, b1 = _weightnorm_conv_params(k1, in_channels, out_channels, k)
    w2, b2 = _weightnorm_conv_params(k2, out_channels, out_channels, k)
    wd4, bd = _weightnorm_conv_params(k3, out_channels, cmid, 1)
    wu4, bu = _weightnorm_conv_params(k4, cmid, out_channels, 1)
    wd = wd4.reshape(out_channels, cmid)                 # 1x1 conv == matmul
    wu = wu4.reshape(cmid, out_channels)
    return (w1, b1, w2, b2, wd, bd, wu, bu)


# ----------------------------- plain-JAX reference --------------------------

def rtab_reference(x_nchw, params, k):
    w1, b1, w2, b2, wd, bd, wu, bu = params
    p = k // 2
    x = jnp.transpose(x_nchw, (0, 2, 3, 1)).astype(jnp.float32)

    def conv(inp, w, b):
        y = jax.lax.conv_general_dilated(
            inp, w, (1, 1), [(p, p), (p, p)],
            dimension_numbers=('NHWC', 'HWIO', 'NHWC'))
        return y + b

    h = jax.nn.relu(conv(x, w1, b1))
    h2 = conv(h, w2, b2)
    pooled = jnp.mean(h2, axis=(1, 2), keepdims=True)
    d = jax.nn.relu(jnp.einsum('nhwc,cd->nhwd', pooled, wd) + bd)
    s = jax.nn.sigmoid(jnp.einsum('nhwc,cd->nhwd', d, wu) + bu)
    out = h2 * s + x
    return jnp.transpose(out, (0, 3, 1, 2))


# ------------------------------------ main -----------------------------------

if __name__ == "__main__":
    N, C, H, W = 2, 8, 16, 16       # in_channels == out_channels (residual add)
    K, R = 3, 2

    root = jax.random.PRNGKey(0)
    kx, kp = jax.random.split(root)
    x = jax.random.normal(kx, (N, C, H, W), jnp.float32)
    params = make_rtab_params(kp, C, C, K, R)

    out = rtab_forward(x, params, K)
    out = jax.block_until_ready(out)

    ref = jax.block_until_ready(rtab_reference(x, params, K))
    # bf16 MXU operands (f32 accumulate) -> slightly looser tolerance than f32.
    np.testing.assert_allclose(np.asarray(out), np.asarray(ref),
                               rtol=2e-2, atol=2e-2)
    assert out.shape == (N, C, H, W)
    print("KERNEL_OK")
</pallas_src>

<mosaic_0001>
module attributes {stable_mosaic.version = 11 : i64} {
  func.func @_rtab_kernel(%arg0: i32, %arg1: memref<2x16x128xf32, #tpu.memory_space<vmem>>, %arg2: memref<3x32x32xbf16, #tpu.memory_space<vmem>>, %arg3: memref<3x128x128xbf16, #tpu.memory_space<vmem>>, %arg4: memref<1x128xf32, #tpu.memory_space<vmem>>, %arg5: memref<3x128x128xbf16, #tpu.memory_space<vmem>>, %arg6: memref<1x128xf32, #tpu.memory_space<vmem>>, %arg7: memref<2x32xf32, #tpu.memory_space<vmem>>, %arg8: memref<128x4xf32, #tpu.memory_space<vmem>>, %arg9: memref<1x4xf32, #tpu.memory_space<vmem>>, %arg10: memref<4x128xf32, #tpu.memory_space<vmem>>, %arg11: memref<1x128xf32, #tpu.memory_space<vmem>>, %arg12: memref<2x16x128xf32, #tpu.memory_space<vmem>>) attributes {dimension_semantics = [#tpu.dimension_semantics<parallel>], iteration_bounds = array<i64: 1>, scalar_prefetch = 0 : i64, scratch_operands = 0 : i64, tpu.core_type = #tpu.core_type<tc>, window_params = [{transform_indices = @transform_0, window_bounds = array<i64: 2, 16, 128>}, {pipeline_mode = #tpu.pipeline_mode<synchronous>, transform_indices = @transform_1, window_bounds = array<i64: 3, 32, 32>}, {pipeline_mode = #tpu.pipeline_mode<synchronous>, transform_indices = @transform_2, window_bounds = array<i64: 3, 128, 128>}, {pipeline_mode = #tpu.pipeline_mode<synchronous>, transform_indices = @transform_3, window_bounds = array<i64: 1, 128>}, {pipeline_mode = #tpu.pipeline_mode<synchronous>, transform_indices = @transform_4, window_bounds = array<i64: 3, 128, 128>}, {pipeline_mode = #tpu.pipeline_mode<synchronous>, transform_indices = @transform_5, window_bounds = array<i64: 1, 128>}, {pipeline_mode = #tpu.pipeline_mode<synchronous>, transform_indices = @transform_6, window_bounds = array<i64: 2, 32>}, {pipeline_mode = #tpu.pipeline_mode<synchronous>, transform_indices = @transform_7, window_bounds = array<i64: 128, 4>}, {pipeline_mode = #tpu.pipeline_mode<synchronous>, transform_indices = @transform_8, window_bounds = array<i64: 1, 4>}, {pipeline_mode = #tpu.pipeline_mode<synchronous>, transform_indices = @transform_9, window_bounds = array<i64: 4, 128>}, {pipeline_mode = #tpu.pipeline_mode<synchronous>, transform_indices = @transform_10, window_bounds = array<i64: 1, 128>}, {transform_indices = @transform_11, window_bounds = array<i64: 2, 16, 128>}]} {
    %c0 = arith.constant 0 : index
    %c0_0 = arith.constant 0 : index
    %c0_1 = arith.constant 0 : index
    %0 = vector.load %arg1[%c0, %c0_0, %c0_1] : memref<2x16x128xf32, #tpu.memory_space<vmem>>, vector<2x16x128xf32>
    %1 = vector.shape_cast %0 : vector<2x16x128xf32> to vector<32x128xf32>
    %2 = arith.truncf %1 : vector<32x128xf32> to vector<32x128xbf16>
    %c1 = arith.constant 1 : index
    %c0_2 = arith.constant 0 : index
    %c0_3 = arith.constant 0 : index
    %3 = vector.load %arg3[%c1, %c0_2, %c0_3] : memref<3x128x128xbf16, #tpu.memory_space<vmem>>, vector<1x128x128xbf16>
    %4 = vector.shape_cast %3 : vector<1x128x128xbf16> to vector<128x128xbf16>
    %cst = arith.constant dense<0.000000e+00> : vector<32x128xf32>
    %5 = tpu.matmul %2, %4, %cst {dimension_numbers = #tpu.dot_dimension_numbers<[1], [0], [0], [1], [0, 0, 1, 1], [], []>} : vector<32x128xbf16>, vector<128x128xbf16>, vector<32x128xf32> -> vector<32x128xf32>
    %c0_4 = arith.constant 0 : index
    %c0_5 = arith.constant 0 : index
    %c0_6 = arith.constant 0 : index
    %6 = vector.load %arg2[%c0_4, %c0_5, %c0_6] : memref<3x32x32xbf16, #tpu.memory_space<vmem>>, vector<1x32x32xbf16>
    %7 = vector.shape_cast %6 : vector<1x32x32xbf16> to vector<32x32xbf16>
    %cst_7 = arith.constant dense<0.000000e+00> : vector<32x128xf32>
    %8 = tpu.matmul %7, %2, %cst_7 {dimension_numbers = #tpu.dot_dimension_numbers<[1], [0], [0], [1], [0, 0, 1, 1], [], []>} : vector<32x32xbf16>, vector<32x128xbf16>, vector<32x128xf32> -> vector<32x128xf32>
    %9 = arith.truncf %8 : vector<32x128xf32> to vector<32x128xbf16>
    %c0_8 = arith.constant 0 : index
    %c0_9 = arith.constant 0 : index
    %c0_10 = arith.constant 0 : index
    %10 = vector.load %arg3[%c0_8, %c0_9, %c0_10] : memref<3x128x128xbf16, #tpu.memory_space<vmem>>, vector<1x128x128xbf16>
    %11 = vector.shape_cast %10 : vector<1x128x128xbf16> to vector<128x128xbf16>
    %cst_11 = arith.constant dense<0.000000e+00> : vector<32x128xf32>
    %12 = tpu.matmul %9, %11, %cst_11 {dimension_numbers = #tpu.dot_dimension_numbers<[1], [0], [0], [1], [0, 0, 1, 1], [], []>} : vector<32x128xbf16>, vector<128x128xbf16>, vector<32x128xf32> -> vector<32x128xf32>
    %13 = arith.addf %5, %12 : vector<32x128xf32>
    %c2 = arith.constant 2 : index
    %c0_12 = arith.constant 0 : index
    %c0_13 = arith.constant 0 : index
    %14 = vector.load %arg2[%c2, %c0_12, %c0_13] : memref<3x32x32xbf16, #tpu.memory_space<vmem>>, vector<1x32x32xbf16>
    %15 = vector.shape_cast %14 : vector<1x32x32xbf16> to vector<32x32xbf16>
    %cst_14 = arith.constant dense<0.000000e+00> : vector<32x128xf32>
    %16 = tpu.matmul %15, %2, %cst_14 {dimension_numbers = #tpu.dot_dimension_numbers<[1], [0], [0], [1], [0, 0, 1, 1], [], []>} : vector<32x32xbf16>, vector<32x128xbf16>, vector<32x128xf32> -> vector<32x128xf32>
    %17 = arith.truncf %16 : vector<32x128xf32> to vector<32x128xbf16>
    %c2_15 = arith.constant 2 : index
    %c0_16 = arith.constant 0 : index
    %c0_17 = arith.constant 0 : index
    %18 = vector.load %arg3[%c2_15, %c0_16, %c0_17] : memref<3x128x128xbf16, #tpu.memory_space<vmem>>, vector<1x128x128xbf16>
    %19 = vector.shape_cast %18 : vector<1x128x128xbf16> to vector<128x128xbf16>
    %cst_18 = arith.constant dense<0.000000e+00> : vector<32x128xf32>
    %20 = tpu.matmul %17, %19, %cst_18 {dimension_numbers = #tpu.dot_dimension_numbers<[1], [0], [0], [1], [0, 0, 1, 1], [], []>} : vector<32x128xbf16>, vector<128x128xbf16>, vector<32x128xf32> -> vector<32x128xf32>
    %21 = arith.addf %13, %20 : vector<32x128xf32>
    %c0_19 = arith.constant 0 : index
    %c0_20 = arith.constant 0 : index
    %22 = vector.load %arg4[%c0_19, %c0_20] : memref<1x128xf32, #tpu.memory_space<vmem>>, vector<1x128xf32>
    %23 = vector.broadcast %22 : vector<1x128xf32> to vector<32x128xf32>
    %24 = arith.addf %21, %23 : vector<32x128xf32>
    %cst_21 = arith.constant 0.000000e+00 : f32
    %25 = vector.broadcast %cst_21 : f32 to vector<32x128xf32>
    %26 = arith.maximumf %24, %25 : vector<32x128xf32>
    %27 = arith.truncf %26 : vector<32x128xf32> to vector<32x128xbf16>
    %c1_22 = arith.constant 1 : index
    %c0_23 = arith.constant 0 : index
    %c0_24 = arith.constant 0 : index
    %28 = vector.load %arg5[%c1_22, %c0_23, %c0_24] : memref<3x128x128xbf16, #tpu.memory_space<vmem>>, vector<1x128x128xbf16>
    %29 = vector.shape_cast %28 : vector<1x128x128xbf16> to vector<128x128xbf16>
    %cst_25 = arith.constant dense<0.000000e+00> : vector<32x128xf32>
    %30 = tpu.matmul %27, %29, %cst_25 {dimension_numbers = #tpu.dot_dimension_numbers<[1], [0], [0], [1], [0, 0, 1, 1], [], []>} : vector<32x128xbf16>, vector<128x128xbf16>, vector<32x128xf32> -> vector<32x128xf32>
    %c0_26 = arith.constant 0 : index
    %c0_27 = arith.constant 0 : index
    %c0_28 = arith.constant 0 : index
    %31 = vector.load %arg2[%c0_26, %c0_27, %c0_28] : memref<3x32x32xbf16, #tpu.memory_space<vmem>>, vector<1x32x32xbf16>
    %32 = vector.shape_cast %31 : vector<1x32x32xbf16> to vector<32x32xbf16>
    %cst_29 = arith.constant dense<0.000000e+00> : vector<32x128xf32>
    %33 = tpu.matmul %32, %27, %cst_29 {dimension_numbers = #tpu.dot_dimension_numbers<[1], [0], [0], [1], [0, 0, 1, 1], [], []>} : vector<32x32xbf16>, vector<32x128xbf16>, vector<32x128xf32> -> vector<32x128xf32>
    %34 = arith.truncf %33 : vector<32x128xf32> to vector<32x128xbf16>
    %c0_30 = arith.constant 0 : index
    %c0_31 = arith.constant 0 : index
    %c0_32 = arith.constant 0 : index
    %35 = vector.load %arg5[%c0_30, %c0_31, %c0_32] : memref<3x128x128xbf16, #tpu.memory_space<vmem>>, vector<1x128x128xbf16>
    %36 = vector.shape_cast %35 : vector<1x128x128xbf16> to vector<128x128xbf16>
    %cst_33 = arith.constant dense<0.000000e+00> : vector<32x128xf32>
    %37 = tpu.matmul %34, %36, %cst_33 {dimension_numbers = #tpu.dot_dimension_numbers<[1], [0], [0], [1], [0, 0, 1, 1], [], []>} : vector<32x128xbf16>, vector<128x128xbf16>, vector<32x128xf32> -> vector<32x128xf32>
    %38 = arith.addf %30, %37 : vector<32x128xf32>
    %c2_34 = arith.constant 2 : index
    %c0_35 = arith.constant 0 : index
    %c0_36 = arith.constant 0 : index
    %39 = vector.load %arg2[%c2_34, %c0_35, %c0_36] : memref<3x32x32xbf16, #tpu.memory_space<vmem>>, vector<1x32x32xbf16>
    %40 = vector.shape_cast %39 : vector<1x32x32xbf16> to vector<32x32xbf16>
    %cst_37 = arith.constant dense<0.000000e+00> : vector<32x128xf32>
    %41 = tpu.matmul %40, %27, %cst_37 {dimension_numbers = #tpu.dot_dimension_numbers<[1], [0], [0], [1], [0, 0, 1, 1], [], []>} : vector<32x32xbf16>, vector<32x128xbf16>, vector<32x128xf32> -> vector<32x128xf32>
    %42 = arith.truncf %41 : vector<32x128xf32> to vector<32x128xbf16>
    %c2_38 = arith.constant 2 : index
    %c0_39 = arith.constant 0 : index
    %c0_40 = arith.constant 0 : index
    %43 = vector.load %arg5[%c2_38, %c0_39, %c0_40] : memref<3x128x128xbf16, #tpu.memory_space<vmem>>, vector<1x128x128xbf16>
    %44 = vector.shape_cast %43 : vector<1x128x128xbf16> to vector<128x128xbf16>
    %cst_41 = arith.constant dense<0.000000e+00> : vector<32x128xf32>
    %45 = tpu.matmul %42, %44, %cst_41 {dimension_numbers = #tpu.dot_dimension_numbers<[1], [0], [0], [1], [0, 0, 1, 1], [], []>} : vector<32x128xbf16>, vector<128x128xbf16>, vector<32x128xf32> -> vector<32x128xf32>
    %46 = arith.addf %38, %45 : vector<32x128xf32>
    %c0_42 = arith.constant 0 : index
    %c0_43 = arith.constant 0 : index
    %47 = vector.load %arg6[%c0_42, %c0_43] : memref<1x128xf32, #tpu.memory_space<vmem>>, vector<1x128xf32>
    %48 = vector.broadcast %47 : vector<1x128xf32> to vector<32x128xf32>
    %49 = arith.addf %46, %48 : vector<32x128xf32>
    %c0_44 = arith.constant 0 : index
    %c0_45 = arith.constant 0 : index
    %50 = vector.load %arg7[%c0_44, %c0_45] : memref<2x32xf32, #tpu.memory_space<vmem>>, vector<2x32xf32>
    %cst_46 = arith.constant dense<0.000000e+00> : vector<2x128xf32>
    %51 = tpu.matmul %50, %49, %cst_46 {dimension_numbers = #tpu.dot_dimension_numbers<[1], [0], [0], [1], [0, 0, 1, 1], [], []>} : vector<2x32xf32>, vector<32x128xf32>, vector<2x128xf32> -> vector<2x128xf32>
    %c0_47 = arith.constant 0 : index
    %c0_48 = arith.constant 0 : index
    %52 = vector.load %arg8[%c0_47, %c0_48] : memref<128x4xf32, #tpu.memory_space<vmem>>, vector<128x4xf32>
    %cst_49 = arith.constant dense<0.000000e+00> : vector<2x4xf32>
    %53 = tpu.matmul %51, %52, %cst_49 {dimension_numbers = #tpu.dot_dimension_numbers<[1], [0], [0], [1], [0, 0, 1, 1], [], []>} : vector<2x128xf32>, vector<128x4xf32>, vector<2x4xf32> -> vector<2x4xf32>
    %c0_50 = arith.constant 0 : index
    %c0_51 = arith.constant 0 : index
    %54 = vector.load %arg9[%c0_50, %c0_51] : memref<1x4xf32, #tpu.memory_space<vmem>>, vector<1x4xf32>
    %55 = vector.broadcast %54 : vector<1x4xf32> to vector<2x4xf32>
    %56 = arith.addf %53, %55 : vector<2x4xf32>
    %cst_52 = arith.constant 0.000000e+00 : f32
    %57 = vector.broadcast %cst_52 : f32 to vector<2x4xf32>
    %58 = arith.maximumf %56, %57 : vector<2x4xf32>
    %c0_53 = arith.constant 0 : index
    %c0_54 = arith.constant 0 : index
    %59 = vector.load %arg10[%c0_53, %c0_54] : memref<4x128xf32, #tpu.memory_space<vmem>>, vector<4x128xf32>
    %cst_55 = arith.constant dense<0.000000e+00> : vector<2x128xf32>
    %60 = tpu.matmul %58, %59, %cst_55 {dimension_numbers = #tpu.dot_dimension_numbers<[1], [0], [0], [1], [0, 0, 1, 1], [], []>} : vector<2x4xf32>, vector<4x128xf32>, vector<2x128xf32> -> vector<2x128xf32>
    %c0_56 = arith.constant 0 : index
    %c0_57 = arith.constant 0 : index
    %61 = vector.load %arg11[%c0_56, %c0_57] : memref<1x128xf32, #tpu.memory_space<vmem>>, vector<1x128xf32>
    %62 = vector.broadcast %61 : vector<1x128xf32> to vector<2x128xf32>
    %63 = arith.addf %60, %62 : vector<2x128xf32>
    %64 = arith.negf %63 : vector<2x128xf32>
    %65 = math.exp %64 : vector<2x128xf32>
    %cst_58 = arith.constant 1.000000e+00 : f32
    %66 = vector.broadcast %cst_58 : f32 to vector<2x128xf32>
    %67 = arith.addf %66, %65 : vector<2x128xf32>
    %68 = arith.divf %66, %67 : vector<2x128xf32>
    %69 = vector.shape_cast %49 : vector<32x128xf32> to vector<2x16x128xf32>
    %70 = vector.shape_cast %68 : vector<2x128xf32> to vector<2x1x128xf32>
    %71 = vector.broadcast %70 : vector<2x1x128xf32> to vector<2x16x128xf32>
    %72 = arith.mulf %69, %71 : vector<2x16x128xf32>
    %73 = arith.addf %72, %0 : vector<2x16x128xf32>
    %c0_59 = arith.constant 0 : index
    %c0_60 = arith.constant 0 : index
    %c0_61 = arith.constant 0 : index
    %74 = vector.load %arg12[%c0_59, %c0_60, %c0_61] : memref<2x16x128xf32, #tpu.memory_space<vmem>>, vector<2x16x128xf32>
    tpu.vector_store %arg12[%c0_59, %c0_60, %c0_61], %73 {strides = array<i32>} : memref<2x16x128xf32, #tpu.memory_space<vmem>>, vector<2x16x128xf32>,
    return
  }
  func.func @transform_0(%arg0: i32) -> (i32, i32, i32) {
    %c0_i32 = arith.constant 0 : i32
    %c0_i32_0 = arith.constant 0 : i32
    %c0_i32_1 = arith.constant 0 : i32
    return %arg0, %c0_i32, %c0_i32_0 : i32, i32, i32
  }
  func.func @transform_1(%arg0: i32) -> (i32, i32, i32) {
    %c0_i32 = arith.constant 0 : i32
    %c0_i32_0 = arith.constant 0 : i32
    %c0_i32_1 = arith.constant 0 : i32
    %c0_i32_2 = arith.constant 0 : i32
    return %c0_i32, %c0_i32_0, %c0_i32_1 : i32, i32, i32
  }
  func.func @transform_2(%arg0: i32) -> (i32, i32, i32) {
    %c0_i32 = arith.constant 0 : i32
    %c0_i32_0 = arith.constant 0 : i32
    %c0_i32_1 = arith.constant 0 : i32
    %c0_i32_2 = arith.constant 0 : i32
    return %c0_i32, %c0_i32_0, %c0_i32_1 : i32, i32, i32
  }
  func.func @transform_3(%arg0: i32) -> (i32, i32) {
    %c0_i32 = arith.constant 0 : i32
    %c0_i32_0 = arith.constant 0 : i32
    %c0_i32_1 = arith.constant 0 : i32
    return %c0_i32, %c0_i32_0 : i32, i32
  }
  func.func @transform_4(%arg0: i32) -> (i32, i32, i32) {
    %c0_i32 = arith.constant 0 : i32
    %c0_i32_0 = arith.constant 0 : i32
    %c0_i32_1 = arith.constant 0 : i32
    %c0_i32_2 = arith.constant 0 : i32
    return %c0_i32, %c0_i32_0, %c0_i32_1 : i32, i32, i32
  }
  func.func @transform_5(%arg0: i32) -> (i32, i32) {
    %c0_i32 = arith.constant 0 : i32
    %c0_i32_0 = arith.constant 0 : i32
    %c0_i32_1 = arith.constant 0 : i32
    return %c0_i32, %c0_i32_0 : i32, i32
  }
  func.func @transform_6(%arg0: i32) -> (i32, i32) {
    %c0_i32 = arith.constant 0 : i32
    %c0_i32_0 = arith.constant 0 : i32
    %c0_i32_1 = arith.constant 0 : i32
    return %c0_i32, %c0_i32_0 : i32, i32
  }
  func.func @transform_7(%arg0: i32) -> (i32, i32) {
    %c0_i32 = arith.constant 0 : i32
    %c0_i32_0 = arith.constant 0 : i32
    %c0_i32_1 = arith.constant 0 : i32
    return %c0_i32, %c0_i32_0 : i32, i32
  }
  func.func @transform_8(%arg0: i32) -> (i32, i32) {
    %c0_i32 = arith.constant 0 : i32
    %c0_i32_0 = arith.constant 0 : i32
    %c0_i32_1 = arith.constant 0 : i32
    return %c0_i32, %c0_i32_0 : i32, i32
  }
  func.func @transform_9(%arg0: i32) -> (i32, i32) {
    %c0_i32 = arith.constant 0 : i32
    %c0_i32_0 = arith.constant 0 : i32
    %c0_i32_1 = arith.constant 0 : i32
    return %c0_i32, %c0_i32_0 : i32, i32
  }
  func.func @transform_10(%arg0: i32) -> (i32, i32) {
    %c0_i32 = arith.constant 0 : i32
    %c0_i32_0 = arith.constant 0 : i32
    %c0_i32_1 = arith.constant 0 : i32
    return %c0_i32, %c0_i32_0 : i32, i32
  }
  func.func @transform_11(%arg0: i32) -> (i32, i32, i32) {
    %c0_i32 = arith.constant 0 : i32
    %c0_i32_0 = arith.constant 0 : i32
    %c0_i32_1 = arith.constant 0 : i32
    return %arg0, %c0_i32, %c0_i32_0 : i32, i32, i32
  }
}

</mosaic_0001>

<llo_original>
// kernel: tpu_custom_call.1
$region0: #{tpu_custom_call.1}
  #allocation0 [shape = 'u32[]', space=smem, size = 0x4, offset = 0x4, fixed_abs, tag = 'smem constant byte address 0x4 - core index']
  #allocation1 [shape = 'u32[144,128]{1,0:T(1,128)}', space=vmem, size = 0x12000, scoped, tag = 'internal scratch']
  %s0 = inlined_call_operand.vmem [shape: f32[2,16,128], index: 0, kind: input, shape index: {}]
  %s1 = inlined_call_operand.vmem [shape: bf16[3,32,32], index: 1, kind: input, shape index: {}]
  %s2 = inlined_call_operand.hbm [shape: bf16[3,128,128], index: 2, kind: input, shape index: {}]
  %s3 = inlined_call_operand.vmem [shape: f32[1,128], index: 3, kind: input, shape index: {}]
  %s4 = inlined_call_operand.hbm [shape: bf16[3,128,128], index: 4, kind: input, shape index: {}]
  %s5 = inlined_call_operand.vmem [shape: f32[1,128], index: 5, kind: input, shape index: {}]
  %s6 = inlined_call_operand.vmem [shape: f32[2,32], index: 6, kind: input, shape index: {}]
  %s7 = inlined_call_operand.vmem [shape: f32[128,4], index: 7, kind: input, shape index: {}]
  %s8 = inlined_call_operand.vmem [shape: f32[1,4], index: 8, kind: input, shape index: {}]
  %s9 = inlined_call_operand.vmem [shape: f32[4,128], index: 9, kind: input, shape index: {}]
  %s10 = inlined_call_operand.vmem [shape: f32[1,128], index: 10, kind: input, shape index: {}]
  %s11 = inlined_call_operand.hbm [shape: f32[2,16,128], index: 11, kind: output, shape index: {}]
  %s12 = sld [smem:[#allocation0]]
  $region62: #{tpu_custom_call.1} parent=0
    _
  %s14 = ssub.s32 1, %s12
  %s15 = scalar_select 0, %s14, %s12
  $region1: #{tpu_custom_call.1} parent=0
    #allocation2 [shape = 'u8[98304]{0}', space=vmem, size = 0x18000, scoped, tag = 'input window, operand 2, single buffered']
    #allocation3 [shape = 's32[1]{0}', space=sflag, size = 0x4, scoped, tag = 'scoped memory for tpu_custom_call.1']
    #allocation4 [shape = 's32[1]{0}', space=sflag, size = 0x4, scoped, tag = 'scoped memory for tpu_custom_call.1']
    #allocation5 [shape = 'u8[98304]{0}', space=vmem, size = 0x18000, scoped, tag = 'input window, operand 4, single buffered']
    #allocation6 [shape = 's32[1]{0}', space=sflag, size = 0x4, scoped, tag = 'scoped memory for tpu_custom_call.1']
    #allocation7 [shape = 'u8[16384]{0}', space=vmem, size = 0x4000, scoped, tag = 'output window, operand 0, single buffered']
    %16 = vsyncpa [#allocation3], 0
    %17 = vsyncpa [#allocation6], 0
    %18 = vsyncpa [#allocation4], 0
    // Predicated region
    $region2: #{tpu_custom_call.1} parent=1 // pred_check
      _
    $region3: #{tpu_custom_call.1} parent=1 // pred_check_branch
      %20 = sbr.rel (0) target = $region5
    $region4: #{tpu_custom_call.1} parent=1 // pred_region
      _
    $region5: #{tpu_custom_call.1} parent=1 // pred_fallthru
      _
    // Predicated region
    $region6: #{tpu_custom_call.1} parent=1 // pred_check
      _
    $region7: #{tpu_custom_call.1} parent=1 // pred_check_branch
      %22 = sbr.rel (0) target = $region9
    $region8: #{tpu_custom_call.1} parent=1 // pred_region
      _
    $region9: #{tpu_custom_call.1} parent=1 // pred_fallthru
      _
    // Predicated region
    $region10: #{tpu_custom_call.1} parent=1 // pred_check
      _
    $region11: #{tpu_custom_call.1} parent=1 // pred_check_branch
      %24 = sbr.rel (0) target = $region13
    $region12: #{tpu_custom_call.1} parent=1 // pred_region
      %s26 = ssub.s32 3072, 3072
      %27 = vsyncadd [#allocation3], %s26
      %s28 = sshll.u32 [#allocation2], 4
      %s29 = int_to_ptr.vmem [resolvable:$true] %s28
      %34 = dma.hbm_to_vmem [thread:$0]  %s2, 3072, %s29, [#allocation3], 64, 64, 4
    $region13: #{tpu_custom_call.1} parent=1 // pred_fallthru
      _
    // Predicated region
    $region14: #{tpu_custom_call.1} parent=1 // pred_check
      _
    $region15: #{tpu_custom_call.1} parent=1 // pred_check_branch
      %36 = sbr.rel (0) target = $region17
    $region16: #{tpu_custom_call.1} parent=1 // pred_region
      _
    $region17: #{tpu_custom_call.1} parent=1 // pred_fallthru
      _
    // Predicated region
    $region18: #{tpu_custom_call.1} parent=1 // pred_check
      _
    $region19: #{tpu_custom_call.1} parent=1 // pred_check_branch
      %38 = sbr.rel (0) target = $region21
    $region20: #{tpu_custom_call.1} parent=1 // pred_region
      %s40 = ssub.s32 3072, 3072
      %41 = vsyncadd [#allocation6], %s40
      %s42 = sshll.u32 [#allocation5], 4
      %s43 = int_to_ptr.vmem [resolvable:$true] %s42
      %48 = dma.hbm_to_vmem [thread:$0]  %s4, 3072, %s43, [#allocation6], 64, 64, 4
    $region21: #{tpu_custom_call.1} parent=1 // pred_fallthru
      _
    // Predicated region
    $region22: #{tpu_custom_call.1} parent=1 // pred_check
      _
    $region23: #{tpu_custom_call.1} parent=1 // pred_check_branch
      %50 = sbr.rel (0) target = $region25
    $region24: #{tpu_custom_call.1} parent=1 // pred_region
      _
    $region25: #{tpu_custom_call.1} parent=1 // pred_fallthru
      _
    // Predicated region
    $region26: #{tpu_custom_call.1} parent=1 // pred_check
      _
    $region27: #{tpu_custom_call.1} parent=1 // pred_check_branch
      %52 = sbr.rel (0) target = $region29
    $region28: #{tpu_custom_call.1} parent=1 // pred_region
      _
    $region29: #{tpu_custom_call.1} parent=1 // pred_fallthru
      _
    // Predicated region
    $region30: #{tpu_custom_call.1} parent=1 // pred_check
      _
    $region31: #{tpu_custom_call.1} parent=1 // pred_check_branch
      %54 = sbr.rel (0) target = $region33
    $region32: #{tpu_custom_call.1} parent=1 // pred_region
      _
    $region33: #{tpu_custom_call.1} parent=1 // pred_fallthru
      _
    // Predicated region
    $region34: #{tpu_custom_call.1} parent=1 // pred_check
      _
    $region35: #{tpu_custom_call.1} parent=1 // pred_check_branch
      %56 = sbr.rel (0) target = $region37
    $region36: #{tpu_custom_call.1} parent=1 // pred_region
      _
    $region37: #{tpu_custom_call.1} parent=1 // pred_fallthru
      _
    // Predicated region
    $region38: #{tpu_custom_call.1} parent=1 // pred_check
      _
    $region39: #{tpu_custom_call.1} parent=1 // pred_check_branch
      %58 = sbr.rel (0) target = $region41
    $region40: #{tpu_custom_call.1} parent=1 // pred_region
      _
    $region41: #{tpu_custom_call.1} parent=1 // pred_fallthru
      _
    // Predicated region
    $region42: #{tpu_custom_call.1} parent=1 // pred_check
      _
    $region43: #{tpu_custom_call.1} parent=1 // pred_check_branch
      %60 = sbr.rel (0) target = $region45
    $region44: #{tpu_custom_call.1} parent=1 // pred_region
      _
    $region45: #{tpu_custom_call.1} parent=1 // pred_fallthru
      _
    // Predicated region
    $region46: #{tpu_custom_call.1} parent=1 // pred_check
      _
    $region47: #{tpu_custom_call.1} parent=1 // pred_check_branch
      %62 = sbr.rel (0) target = $region49
    $region48: #{tpu_custom_call.1} parent=1 // pred_region
      %63 = dma.done [#allocation3], 3072
    $region49: #{tpu_custom_call.1} parent=1 // pred_fallthru
      _
    // Predicated region
    $region50: #{tpu_custom_call.1} parent=1 // pred_check
      _
    $region51: #{tpu_custom_call.1} parent=1 // pred_check_branch
      %65 = sbr.rel (0) target = $region53
    $region52: #{tpu_custom_call.1} parent=1 // pred_region
      %66 = dma.done [#allocation6], 3072
    $region53: #{tpu_custom_call.1} parent=1 // pred_fallthru
      _
    %v68 = vld [vmem:[%s0] sm:$0xff]
    %v69 = vld [vmem:[%s0 + $0x8] sm:$0xff]
    %v70 = vld [vmem:[%s0 + $0x10] sm:$0xff]
    %v71 = vld [vmem:[%s0 + $0x18] sm:$0xff]
    %v72 = vpack.c.bf16 %v69, %v68
    %v73 = vpack.c.bf16 %v71, %v70
    %s74 = scalar_lea.vmem [#allocation2], 64
    %v75 = vld [vmem:[%s74] sm:$0xf]
    %v76 = vld [vmem:[%s74 + $0x4] sm:$0xf]
    %v77 = vld [vmem:[%s74 + $0x8] sm:$0xf]
    %v78 = vld [vmem:[%s74 + $0xc] sm:$0xf]
    %v79 = vld [vmem:[%s74 + $0x10] sm:$0xf]
    %v80 = vld [vmem:[%s74 + $0x14] sm:$0xf]
    %v81 = vld [vmem:[%s74 + $0x18] sm:$0xf]
    %v82 = vld [vmem:[%s74 + $0x1c] sm:$0xf]
    %v83 = vld [vmem:[%s74 + $0x20] sm:$0xf]
    %v84 = vld [vmem:[%s74 + $0x24] sm:$0xf]
    %v85 = vld [vmem:[%s74 + $0x28] sm:$0xf]
    %v86 = vld [vmem:[%s74 + $0x2c] sm:$0xf]
    %v87 = vld [vmem:[%s74 + $0x30] sm:$0xf]
    %v88 = vld [vmem:[%s74 + $0x34] sm:$0xf]
    %v89 = vld [vmem:[%s74 + $0x38] sm:$0xf]
    %v90 = vld [vmem:[%s74 + $0x3c] sm:$0xf]
    %v91 = vld [vmem:[%s1] sm:$0xf]
    %v92 = vld [vmem:[%s1 + $0x4] sm:$0xf]
    %v93 = vld [vmem:[%s1 + $0x8] sm:$0xf]
    %v94 = vld [vmem:[%s1 + $0xc] sm:$0xf]
    %v99 = vunpack.c.l.b16 %v91
    %v100 = vunpack.c.l.b16 %v92
    %v101 = vunpack.c.l.b16 %v93
    %v102 = vunpack.c.l.b16 %v94
    %v103 = vpack.c.b16 %v100, %v99
    %v104 = vpack.c.b16 %v102, %v101
    %vm105 = vcmask 261120
    %v107 = vsel %vm105, %v103, 0
    %v110 = vsel %vm105, %v104, 0
    %112 = vmatprep.subr.bf16.mxu0 0
    %113 = vmatpush1.bf16.msra.mxu0 %v72
    %114 = vmatprep.subr.bf16.mxu0 0
    %115 = vmatpush1.bf16.msra.mxu0 %v73
    %116 = vmatprep.subr.bf16.mxu0 0
    %117 = vmatpush1.bf16.msra.mxu0 0
    %118 = vmatprep.subr.bf16.mxu0 0
    %119 = vmatpush1.bf16.msra.mxu0 0
    %120 = vmatprep.subr.bf16.mxu0 0
    %121 = vmatpush1.bf16.msra.mxu0 0
    %122 = vmatprep.subr.bf16.mxu0 0
    %123 = vmatpush1.bf16.msra.mxu0 0
    %124 = vmatprep.subr.bf16.mxu0 0
    %125 = vmatpush1.bf16.msra.mxu0 0
    %126 = vmatprep.subr.bf16.mxu0 0
    %127 = vmatpush1.bf16.msra.mxu0 0
    %128 = vmatprep.subr.bf16.mxu0 0
    %129 = vmatpush1.bf16.msra.mxu0 0
    %130 = vmatprep.subr.bf16.mxu0 0
    %131 = vmatpush1.bf16.msra.mxu0 0
    %132 = vmatprep.subr.bf16.mxu0 0
    %133 = vmatpush1.bf16.msra.mxu0 0
    %134 = vmatprep.subr.bf16.mxu0 0
    %135 = vmatpush1.bf16.msra.mxu0 0
    %136 = vmatprep.subr.bf16.mxu0 0
    %137 = vmatpush1.bf16.msra.mxu0 0
    %138 = vmatprep.subr.bf16.mxu0 0
    %139 = vmatpush1.bf16.msra.mxu0 0
    %140 = vmatprep.subr.bf16.mxu0 0
    %141 = vmatpush1.bf16.msra.mxu0 0
    %142 = vmatprep.subr.bf16.mxu0 0
    %143 = vmatpush1.bf16.msra.mxu0 0
    %144 = vmatprep.mubr.bf16.mxu0 0
    %145 = vmatmul.mubr.bf16.gmra.mrb[0].mxu0 %v107
    %v146 = vpop.f32.mrb[0].mxu0
    %v147 = vadd.f32 0.0, %v146
    %v148 = vpop.f32.mrb[0].mxu0
    %v149 = vpop.f32.mrb[0].mxu0
    %v150 = vadd.f32 0.0, %v149
    %v151 = vpop.f32.mrb[0].mxu0
    %152 = vmatprep.mubr.bf16.mxu0 0
    %153 = vmatmul.mubr.bf16.gmra.mrb[0].mxu0 %v110
    %v154 = vpop.f32.mrb[0].mxu0
    %v155 = vadd.f32 0.0, %v154
    %v156 = vpop.f32.mrb[0].mxu0
    %v157 = vpop.f32.mrb[0].mxu0
    %v158 = vadd.f32 0.0, %v157
    %v159 = vpop.f32.mrb[0].mxu0
    %160 = vdwg.mxu0
    %v161 = vpack.c.bf16 %v150, %v147
    %v162 = vpack.c.bf16 %v158, %v155
    %v163 = vld [vmem:[#allocation2] sm:$0xf]
    %v164 = vld [vmem:[#allocation2 + $0x4] sm:$0xf]
    %v165 = vld [vmem:[#allocation2 + $0x8] sm:$0xf]
    %v166 = vld [vmem:[#allocation2 + $0xc] sm:$0xf]
    %v167 = vld [vmem:[#allocation2 + $0x10] sm:$0xf]
    %v168 = vld [vmem:[#allocation2 + $0x14] sm:$0xf]
    %v169 = vld [vmem:[#allocation2 + $0x18] sm:$0xf]
    %v170 = vld [vmem:[#allocation2 + $0x1c] sm:$0xf]
    %v171 = vld [vmem:[#allocation2 + $0x20] sm:$0xf]
    %v172 = vld [vmem:[#allocation2 + $0x24] sm:$0xf]
    %v173 = vld [vmem:[#allocation2 + $0x28] sm:$0xf]
    %v174 = vld [vmem:[#allocation2 + $0x2c] sm:$0xf]
    %v175 = vld [vmem:[#allocation2 + $0x30] sm:$0xf]
    %v176 = vld [vmem:[#allocation2 + $0x34] sm:$0xf]
    %v177 = vld [vmem:[#allocation2 + $0x38] sm:$0xf]
    %v178 = vld [vmem:[#allocation2 + $0x3c] sm:$0xf]
    %v195 = vunpack.c.l.b16 %v163
    %v196 = vunpack.c.l.b16 %v164
    %v197 = vunpack.c.l.b16 %v165
    %v198 = vunpack.c.l.b16 %v166
    %v199 = vunpack.c.l.b16 %v167
    %v200 = vunpack.c.l.b16 %v168
    %v201 = vunpack.c.l.b16 %v169
    %v202 = vunpack.c.l.b16 %v170
    %v203 = vunpack.c.l.b16 %v171
    %v204 = vunpack.c.l.b16 %v172
    %v205 = vunpack.c.l.b16 %v173
    %v206 = vunpack.c.l.b16 %v174
    %v207 = vunpack.c.l.b16 %v175
    %v208 = vunpack.c.l.b16 %v176
    %v209 = vunpack.c.l.b16 %v177
    %v210 = vunpack.c.l.b16 %v178
    %v211 = vpack.c.b16 %v196, %v195
    %v212 = vpack.c.b16 %v198, %v197
    %v213 = vpack.c.b16 %v200, %v199
    %v214 = vpack.c.b16 %v202, %v201
    %v215 = vpack.c.b16 %v204, %v203
    %v216 = vpack.c.b16 %v206, %v205
    %v217 = vpack.c.b16 %v208, %v207
    %v218 = vpack.c.b16 %v210, %v209
    %227 = vmatprep.subr.bf16.mxu0 0
    %228 = vmatpush1.bf16.msra.mxu0 %v211
    %229 = vmatprep.subr.bf16.mxu0 0
    %230 = vmatpush1.bf16.msra.mxu0 %v212
    %231 = vmatprep.subr.bf16.mxu0 0
    %232 = vmatpush1.bf16.msra.mxu0 %v213
    %233 = vmatprep.subr.bf16.mxu0 0
    %234 = vmatpush1.bf16.msra.mxu0 %v214
    %235 = vmatprep.subr.bf16.mxu0 0
    %236 = vmatpush1.bf16.msra.mxu0 %v215
    %237 = vmatprep.subr.bf16.mxu0 0
    %238 = vmatpush1.bf16.msra.mxu0 %v216
    %239 = vmatprep.subr.bf16.mxu0 0
    %240 = vmatpush1.bf16.msra.mxu0 %v217
    %241 = vmatprep.subr.bf16.mxu0 0
    %242 = vmatpush1.bf16.msra.mxu0 %v218
    %243 = vmatprep.subr.bf16.mxu0 0
    %244 = vmatpush1.bf16.msra.mxu0 0
    %245 = vmatprep.subr.bf16.mxu0 0
    %246 = vmatpush1.bf16.msra.mxu0 0
    %247 = vmatprep.subr.bf16.mxu0 0
    %248 = vmatpush1.bf16.msra.mxu0 0
    %249 = vmatprep.subr.bf16.mxu0 0
    %250 = vmatpush1.bf16.msra.mxu0 0
    %251 = vmatprep.subr.bf16.mxu0 0
    %252 = vmatpush1.bf16.msra.mxu0 0
    %253 = vmatprep.subr.bf16.mxu0 0
    %254 = vmatpush1.bf16.msra.mxu0 0
    %255 = vmatprep.subr.bf16.mxu0 0
    %256 = vmatpush1.bf16.msra.mxu0 0
    %257 = vmatprep.subr.bf16.mxu0 0
    %258 = vmatpush1.bf16.msra.mxu0 0
    %259 = vmatprep.mubr.bf16.mxu0 0
    %260 = vmatmul.mubr.bf16.gmra.mrb[0].mxu0 %v161
    %v261 = vpop.f32.mrb[0].mxu0
    %v262 = vadd.f32 0.0, %v261
    %v263 = vpop.f32.mrb[0].mxu0
    %v264 = vpop.f32.mrb[0].mxu0
    %v265 = vadd.f32 0.0, %v264
    %v266 = vpop.f32.mrb[0].mxu0
    %267 = vmatprep.mubr.bf16.mxu0 0
    %268 = vmatmul.mubr.bf16.gmra.mrb[0].mxu0 %v162
    %v269 = vpop.f32.mrb[0].mxu0
    %v270 = vadd.f32 0.0, %v269
    %v271 = vpop.f32.mrb[0].mxu0
    %v272 = vpop.f32.mrb[0].mxu0
    %v273 = vadd.f32 0.0, %v272
    %v274 = vpop.f32.mrb[0].mxu0
    %275 = vdwg.mxu0
    %v292 = vunpack.c.l.b16 %v75
    %v293 = vunpack.c.l.b16 %v76
    %v294 = vunpack.c.l.b16 %v77
    %v295 = vunpack.c.l.b16 %v78
    %v296 = vunpack.c.l.b16 %v79
    %v297 = vunpack.c.l.b16 %v80
    %v298 = vunpack.c.l.b16 %v81
    %v299 = vunpack.c.l.b16 %v82
    %v300 = vunpack.c.l.b16 %v83
    %v301 = vunpack.c.l.b16 %v84
    %v302 = vunpack.c.l.b16 %v85
    %v303 = vunpack.c.l.b16 %v86
    %v304 = vunpack.c.l.b16 %v87
    %v305 = vunpack.c.l.b16 %v88
    %v306 = vunpack.c.l.b16 %v89
    %v307 = vunpack.c.l.b16 %v90
    %v308 = vpack.c.b16 %v293, %v292
    %v309 = vpack.c.b16 %v295, %v294
    %v310 = vpack.c.b16 %v297, %v296
    %v311 = vpack.c.b16 %v299, %v298
    %v312 = vpack.c.b16 %v301, %v300
    %v313 = vpack.c.b16 %v303, %v302
    %v314 = vpack.c.b16 %v305, %v304
    %v315 = vpack.c.b16 %v307, %v306
    %324 = vmatprep.subr.bf16.mxu0 0
    %325 = vmatpush1.bf16.msra.mxu0 %v308
    %326 = vmatprep.subr.bf16.mxu0 0
    %327 = vmatpush1.bf16.msra.mxu0 %v309
    %328 = vmatprep.subr.bf16.mxu0 0
    %329 = vmatpush1.bf16.msra.mxu0 %v310
    %330 = vmatprep.subr.bf16.mxu0 0
    %331 = vmatpush1.bf16.msra.mxu0 %v311
    %332 = vmatprep.subr.bf16.mxu0 0
    %333 = vmatpush1.bf16.msra.mxu0 %v312
    %334 = vmatprep.subr.bf16.mxu0 0
    %335 = vmatpush1.bf16.msra.mxu0 %v313
    %336 = vmatprep.subr.bf16.mxu0 0
    %337 = vmatpush1.bf16.msra.mxu0 %v314
    %338 = vmatprep.subr.bf16.mxu0 0
    %339 = vmatpush1.bf16.msra.mxu0 %v315
    %340 = vmatprep.subr.bf16.mxu0 0
    %341 = vmatpush1.bf16.msra.mxu0 0
    %342 = vmatprep.subr.bf16.mxu0 0
    %343 = vmatpush1.bf16.msra.mxu0 0
    %344 = vmatprep.subr.bf16.mxu0 0
    %345 = vmatpush1.bf16.msra.mxu0 0
    %346 = vmatprep.subr.bf16.mxu0 0
    %347 = vmatpush1.bf16.msra.mxu0 0
    %348 = vmatprep.subr.bf16.mxu0 0
    %349 = vmatpush1.bf16.msra.mxu0 0
    %350 = vmatprep.subr.bf16.mxu0 0
    %351 = vmatpush1.bf16.msra.mxu0 0
    %352 = vmatprep.subr.bf16.mxu0 0
    %353 = vmatpush1.bf16.msra.mxu0 0
    %354 = vmatprep.subr.bf16.mxu0 0
    %355 = vmatpush1.bf16.msra.mxu0 0
    %356 = vmatprep.mubr.bf16.mxu0 0
    %357 = vmatmul.mubr.bf16.gmra.mrb[0].mxu0 %v72
    %v358 = vpop.f32.mrb[0].mxu0
    %v359 = vadd.f32 %v262, %v358
    %v360 = vpop.f32.mrb[0].mxu0
    %v361 = vpop.f32.mrb[0].mxu0
    %v362 = vadd.f32 %v265, %v361
    %v363 = vpop.f32.mrb[0].mxu0
    %364 = vmatprep.mubr.bf16.mxu0 0
    %365 = vmatmul.mubr.bf16.gmra.mrb[0].mxu0 %v73
    %v366 = vpop.f32.mrb[0].mxu0
    %v367 = vadd.f32 %v270, %v366
    %v368 = vpop.f32.mrb[0].mxu0
    %v369 = vpop.f32.mrb[0].mxu0
    %v370 = vadd.f32 %v273, %v369
    %v371 = vpop.f32.mrb[0].mxu0
    %372 = vdwg.mxu0
    %s373 = scalar_lea.vmem %s1, 32
    %v374 = vld [vmem:[%s373] sm:$0xf]
    %v375 = vld [vmem:[%s373 + $0x4] sm:$0xf]
    %v376 = vld [vmem:[%s373 + $0x8] sm:$0xf]
    %v377 = vld [vmem:[%s373 + $0xc] sm:$0xf]
    %v382 = vunpack.c.l.b16 %v374
    %v383 = vunpack.c.l.b16 %v375
    %v384 = vunpack.c.l.b16 %v376
    %v385 = vunpack.c.l.b16 %v377
    %v386 = vpack.c.b16 %v383, %v382
    %v387 = vpack.c.b16 %v385, %v384
    %v389 = vsel %vm105, %v386, 0
    %v392 = vsel %vm105, %v387, 0
    %394 = vmatprep.subr.bf16.mxu0 0
    %395 = vmatpush1.bf16.msra.mxu0 %v72
    %396 = vmatprep.subr.bf16.mxu0 0
    %397 = vmatpush1.bf16.msra.mxu0 %v73
    %398 = vmatprep.subr.bf16.mxu0 0
    %399 = vmatpush1.bf16.msra.mxu0 0
    %400 = vmatprep.subr.bf16.mxu0 0
    %401 = vmatpush1.bf16.msra.mxu0 0
    %402 = vmatprep.subr.bf16.mxu0 0
    %403 = vmatpush1.bf16.msra.mxu0 0
    %404 = vmatprep.subr.bf16.mxu0 0
    %405 = vmatpush1.bf16.msra.mxu0 0
    %406 = vmatprep.subr.bf16.mxu0 0
    %407 = vmatpush1.bf16.msra.mxu0 0
    %408 = vmatprep.subr.bf16.mxu0 0
    %409 = vmatpush1.bf16.msra.mxu0 0
    %410 = vmatprep.subr.bf16.mxu0 0
    %411 = vmatpush1.bf16.msra.mxu0 0
    %412 = vmatprep.subr.bf16.mxu0 0
    %413 = vmatpush1.bf16.msra.mxu0 0
    %414 = vmatprep.subr.bf16.mxu0 0
    %415 = vmatpush1.bf16.msra.mxu0 0
    %416 = vmatprep.subr.bf16.mxu0 0
    %417 = vmatpush1.bf16.msra.mxu0 0
    %418 = vmatprep.subr.bf16.mxu0 0
    %419 = vmatpush1.bf16.msra.mxu0 0
    %420 = vmatprep.subr.bf16.mxu0 0
    %421 = vmatpush1.bf16.msra.mxu0 0
    %422 = vmatprep.subr.bf16.mxu0 0
    %423 = vmatpush1.bf16.msra.mxu0 0
    %424 = vmatprep.subr.bf16.mxu0 0
    %425 = vmatpush1.bf16.msra.mxu0 0
    %426 = vmatprep.mubr.bf16.mxu0 0
    %427 = vmatmul.mubr.bf16.gmra.mrb[0].mxu0 %v389
    %v428 = vpop.f32.mrb[0].mxu0
    %v429 = vadd.f32 0.0, %v428
    %v430 = vpop.f32.mrb[0].mxu0
    %v431 = vpop.f32.mrb[0].mxu0
    %v432 = vadd.f32 0.0, %v431
    %v433 = vpop.f32.mrb[0].mxu0
    %434 = vmatprep.mubr.bf16.mxu0 0
    %435 = vmatmul.mubr.bf16.gmra.mrb[0].mxu0 %v392
    %v436 = vpop.f32.mrb[0].mxu0
    %v437 = vadd.f32 0.0, %v436
    %v438 = vpop.f32.mrb[0].mxu0
    %v439 = vpop.f32.mrb[0].mxu0
    %v440 = vadd.f32 0.0, %v439
    %v441 = vpop.f32.mrb[0].mxu0
    %442 = vdwg.mxu0
    %v443 = vpack.c.bf16 %v432, %v429
    %v444 = vpack.c.bf16 %v440, %v437
    %s445 = scalar_lea.vmem [#allocation2], 128
    %v446 = vld [vmem:[%s445] sm:$0xf]
    %v447 = vld [vmem:[%s445 + $0x4] sm:$0xf]
    %v448 = vld [vmem:[%s445 + $0x8] sm:$0xf]
    %v449 = vld [vmem:[%s445 + $0xc] sm:$0xf]
    %v450 = vld [vmem:[%s445 + $0x10] sm:$0xf]
    %v451 = vld [vmem:[%s445 + $0x14] sm:$0xf]
    %v452 = vld [vmem:[%s445 + $0x18] sm:$0xf]
    %v453 = vld [vmem:[%s445 + $0x1c] sm:$0xf]
    %v454 = vld [vmem:[%s445 + $0x20] sm:$0xf]
    %v455 = vld [vmem:[%s445 + $0x24] sm:$0xf]
    %v456 = vld [vmem:[%s445 + $0x28] sm:$0xf]
    %v457 = vld [vmem:[%s445 + $0x2c] sm:$0xf]
    %v458 = vld [vmem:[%s445 + $0x30] sm:$0xf]
    %v459 = vld [vmem:[%s445 + $0x34] sm:$0xf]
    %v460 = vld [vmem:[%s445 + $0x38] sm:$0xf]
    %v461 = vld [vmem:[%s445 + $0x3c] sm:$0xf]
    %v478 = vunpack.c.l.b16 %v446
    %v479 = vunpack.c.l.b16 %v447
    %v480 = vunpack.c.l.b16 %v448
    %v481 = vunpack.c.l.b16 %v449
    %v482 = vunpack.c.l.b16 %v450
    %v483 = vunpack.c.l.b16 %v451
    %v484 = vunpack.c.l.b16 %v452
    %v485 = vunpack.c.l.b16 %v453
    %v486 = vunpack.c.l.b16 %v454
    %v487 = vunpack.c.l.b16 %v455
    %v488 = vunpack.c.l.b16 %v456
    %v489 = vunpack.c.l.b16 %v457
    %v490 = vunpack.c.l.b16 %v458
    %v491 = vunpack.c.l.b16 %v459
    %v492 = vunpack.c.l.b16 %v460
    %v493 = vunpack.c.l.b16 %v461
    %v494 = vpack.c.b16 %v479, %v478
    %v495 = vpack.c.b16 %v481, %v480
    %v496 = vpack.c.b16 %v483, %v482
    %v497 = vpack.c.b16 %v485, %v484
    %v498 = vpack.c.b16 %v487, %v486
    %v499 = vpack.c.b16 %v489, %v488
    %v500 = vpack.c.b16 %v491, %v490
    %v501 = vpack.c.b16 %v493, %v492
    %510 = vmatprep.subr.bf16.mxu0 0
    %511 = vmatpush1.bf16.msra.mxu0 %v494
    %512 = vmatprep.subr.bf16.mxu0 0
    %513 = vmatpush1.bf16.msra.mxu0 %v495
    %514 = vmatprep.subr.bf16.mxu0 0
    %515 = vmatpush1.bf16.msra.mxu0 %v496
    %516 = vmatprep.subr.bf16.mxu0 0
    %517 = vmatpush1.bf16.msra.mxu0 %v497
    %518 = vmatprep.subr.bf16.mxu0 0
    %519 = vmatpush1.bf16.msra.mxu0 %v498
    %520 = vmatprep.subr.bf16.mxu0 0
    %521 = vmatpush1.bf16.msra.mxu0 %v499
    %522 = vmatprep.subr.bf16.mxu0 0
    %523 = vmatpush1.bf16.msra.mxu0 %v500
    %524 = vmatprep.subr.bf16.mxu0 0
    %525 = vmatpush1.bf16.msra.mxu0 %v501
    %526 = vmatprep.subr.bf16.mxu0 0
    %527 = vmatpush1.bf16.msra.mxu0 0
    %528 = vmatprep.subr.bf16.mxu0 0
    %529 = vmatpush1.bf16.msra.mxu0 0
    %530 = vmatprep.subr.bf16.mxu0 0
    %531 = vmatpush1.bf16.msra.mxu0 0
    %532 = vmatprep.subr.bf16.mxu0 0
    %533 = vmatpush1.bf16.msra.mxu0 0
    %534 = vmatprep.subr.bf16.mxu0 0
    %535 = vmatpush1.bf16.msra.mxu0 0
    %536 = vmatprep.subr.bf16.mxu0 0
    %537 = vmatpush1.bf16.msra.mxu0 0
    %538 = vmatprep.subr.bf16.mxu0 0
    %539 = vmatpush1.bf16.msra.mxu0 0
    %540 = vmatprep.subr.bf16.mxu0 0
    %541 = vmatpush1.bf16.msra.mxu0 0
    %542 = vmatprep.mubr.bf16.mxu0 0
    %543 = vmatmul.mubr.bf16.gmra.mrb[0].mxu0 %v443
    %v544 = vpop.f32.mrb[0].mxu0
    %v545 = vadd.f32 0.0, %v544
    %v546 = vpop.f32.mrb[0].mxu0
    %v547 = vpop.f32.mrb[0].mxu0
    %v548 = vadd.f32 0.0, %v547
    %v549 = vpop.f32.mrb[0].mxu0
    %550 = vmatprep.mubr.bf16.mxu0 0
    %551 = vmatmul.mubr.bf16.gmra.mrb[0].mxu0 %v444
    %v552 = vpop.f32.mrb[0].mxu0
    %v553 = vadd.f32 0.0, %v552
    %v554 = vpop.f32.mrb[0].mxu0
    %v555 = vpop.f32.mrb[0].mxu0
    %v556 = vadd.f32 0.0, %v555
    %v557 = vpop.f32.mrb[0].mxu0
    %558 = vdwg.mxu0
    %v559 = vadd.f32 %v359, %v545
    %v560 = vadd.f32 %v362, %v548
    %v561 = vadd.f32 %v367, %v553
    %v562 = vadd.f32 %v370, %v556
    %v563 = vld [vmem:[%s3] sm:$0x1]
    %v565 = vlaneseq
    %v566 = vshrl.u32 %v565, 7
    %v567 = vsub.s32 0, %v566
    %v568 = vrot.slane %v563, %v567
    %v570 = vadd.f32 %v559, %v568
    %v571 = vadd.f32 %v560, %v568
    %v572 = vadd.f32 %v561, %v568
    %v573 = vadd.f32 %v562, %v568
    %v574 = vmax.f32 %v570, 0.0
    %v575 = vmax.f32 %v571, 0.0
    %v576 = vmax.f32 %v572, 0.0
    %v577 = vmax.f32 %v573, 0.0
    %v578 = vpack.c.bf16 %v575, %v574
    %v579 = vpack.c.bf16 %v577, %v576
    %s580 = scalar_lea.vmem [#allocation5], 64
    %v581 = vld [vmem:[%s580] sm:$0xf]
    %v582 = vld [vmem:[%s580 + $0x4] sm:$0xf]
    %v583 = vld [vmem:[%s580 + $0x8] sm:$0xf]
    %v584 = vld [vmem:[%s580 + $0xc] sm:$0xf]
    %v585 = vld [vmem:[%s580 + $0x10] sm:$0xf]
    %v586 = vld [vmem:[%s580 + $0x14] sm:$0xf]
    %v587 = vld [vmem:[%s580 + $0x18] sm:$0xf]
    %v588 = vld [vmem:[%s580 + $0x1c] sm:$0xf]
    %v589 = vld [vmem:[%s580 + $0x20] sm:$0xf]
    %v590 = vld [vmem:[%s580 + $0x24] sm:$0xf]
    %v591 = vld [vmem:[%s580 + $0x28] sm:$0xf]
    %v592 = vld [vmem:[%s580 + $0x2c] sm:$0xf]
    %v593 = vld [vmem:[%s580 + $0x30] sm:$0xf]
    %v594 = vld [vmem:[%s580 + $0x34] sm:$0xf]
    %v595 = vld [vmem:[%s580 + $0x38] sm:$0xf]
    %v596 = vld [vmem:[%s580 + $0x3c] sm:$0xf]
    %597 = vmatprep.subr.bf16.mxu0 0
    %598 = vmatpush1.bf16.msra.mxu0 %v578
    %599 = vmatprep.subr.bf16.mxu0 0
    %600 = vmatpush1.bf16.msra.mxu0 %v579
    %601 = vmatprep.subr.bf16.mxu0 0
    %602 = vmatpush1.bf16.msra.mxu0 0
    %603 = vmatprep.subr.bf16.mxu0 0
    %604 = vmatpush1.bf16.msra.mxu0 0
    %605 = vmatprep.subr.bf16.mxu0 0
    %606 = vmatpush1.bf16.msra.mxu0 0
    %607 = vmatprep.subr.bf16.mxu0 0
    %608 = vmatpush1.bf16.msra.mxu0 0
    %609 = vmatprep.subr.bf16.mxu0 0
    %610 = vmatpush1.bf16.msra.mxu0 0
    %611 = vmatprep.subr.bf16.mxu0 0
    %612 = vmatpush1.bf16.msra.mxu0 0
    %613 = vmatprep.subr.bf16.mxu0 0
    %614 = vmatpush1.bf16.msra.mxu0 0
    %615 = vmatprep.subr.bf16.mxu0 0
    %616 = vmatpush1.bf16.msra.mxu0 0
    %617 = vmatprep.subr.bf16.mxu0 0
    %618 = vmatpush1.bf16.msra.mxu0 0
    %619 = vmatprep.subr.bf16.mxu0 0
    %620 = vmatpush1.bf16.msra.mxu0 0
    %621 = vmatprep.subr.bf16.mxu0 0
    %622 = vmatpush1.bf16.msra.mxu0 0
    %623 = vmatprep.subr.bf16.mxu0 0
    %624 = vmatpush1.bf16.msra.mxu0 0
    %625 = vmatprep.subr.bf16.mxu0 0
    %626 = vmatpush1.bf16.msra.mxu0 0
    %627 = vmatprep.subr.bf16.mxu0 0
    %628 = vmatpush1.bf16.msra.mxu0 0
    %629 = vmatprep.mubr.bf16.mxu0 0
    %630 = vmatmul.mubr.bf16.gmra.mrb[0].mxu0 %v107
    %v631 = vpop.f32.mrb[0].mxu0
    %v632 = vadd.f32 0.0, %v631
    %v633 = vpop.f32.mrb[0].mxu0
    %v634 = vpop.f32.mrb[0].mxu0
    %v635 = vadd.f32 0.0, %v634
    %v636 = vpop.f32.mrb[0].mxu0
    %637 = vmatprep.mubr.bf16.mxu0 0
    %638 = vmatmul.mubr.bf16.gmra.mrb[0].mxu0 %v110
    %v639 = vpop.f32.mrb[0].mxu0
    %v640 = vadd.f32 0.0, %v639
    %v641 = vpop.f32.mrb[0].mxu0
    %v642 = vpop.f32.mrb[0].mxu0
    %v643 = vadd.f32 0.0, %v642
    %v644 = vpop.f32.mrb[0].mxu0
    %645 = vdwg.mxu0
    %v646 = vpack.c.bf16 %v635, %v632
    %v647 = vpack.c.bf16 %v643, %v640
    %v648 = vld [vmem:[#allocation5] sm:$0xf]
    %v649 = vld [vmem:[#allocation5 + $0x4] sm:$0xf]
    %v650 = vld [vmem:[#allocation5 + $0x8] sm:$0xf]
    %v651 = vld [vmem:[#allocation5 + $0xc] sm:$0xf]
    %v652 = vld [vmem:[#allocation5 + $0x10] sm:$0xf]
    %v653 = vld [vmem:[#allocation5 + $0x14] sm:$0xf]
    %v654 = vld [vmem:[#allocation5 + $0x18] sm:$0xf]
    %v655 = vld [vmem:[#allocation5 + $0x1c] sm:$0xf]
    %v656 = vld [vmem:[#allocation5 + $0x20] sm:$0xf]
    %v657 = vld [vmem:[#allocation5 + $0x24] sm:$0xf]
    %v658 = vld [vmem:[#allocation5 + $0x28] sm:$0xf]
    %v659 = vld [vmem:[#allocation5 + $0x2c] sm:$0xf]
    %v660 = vld [vmem:[#allocation5 + $0x30] sm:$0xf]
    %v661 = vld [vmem:[#allocation5 + $0x34] sm:$0xf]
    %v662 = vld [vmem:[#allocation5 + $0x38] sm:$0xf]
    %v663 = vld [vmem:[#allocation5 + $0x3c] sm:$0xf]
    %v680 = vunpack.c.l.b16 %v648
    %v681 = vunpack.c.l.b16 %v649
    %v682 = vunpack.c.l.b16 %v650
    %v683 = vunpack.c.l.b16 %v651
    %v684 = vunpack.c.l.b16 %v652
    %v685 = vunpack.c.l.b16 %v653
    %v686 = vunpack.c.l.b16 %v654
    %v687 = vunpack.c.l.b16 %v655
    %v688 = vunpack.c.l.b16 %v656
    %v689 = vunpack.c.l.b16 %v657
    %v690 = vunpack.c.l.b16 %v658
    %v691 = vunpack.c.l.b16 %v659
    %v692 = vunpack.c.l.b16 %v660
    %v693 = vunpack.c.l.b16 %v661
    %v694 = vunpack.c.l.b16 %v662
    %v695 = vunpack.c.l.b16 %v663
    %v696 = vpack.c.b16 %v681, %v680
    %v697 = vpack.c.b16 %v683, %v682
    %v698 = vpack.c.b16 %v685, %v684
    %v699 = vpack.c.b16 %v687, %v686
    %v700 = vpack.c.b16 %v689, %v688
    %v701 = vpack.c.b16 %v691, %v690
    %v702 = vpack.c.b16 %v693, %v692
    %v703 = vpack.c.b16 %v695, %v694
    %712 = vmatprep.subr.bf16.mxu0 0
    %713 = vmatpush1.bf16.msra.mxu0 %v696
    %714 = vmatprep.subr.bf16.mxu0 0
    %715 = vmatpush1.bf16.msra.mxu0 %v697
    %716 = vmatprep.subr.bf16.mxu0 0
    %717 = vmatpush1.bf16.msra.mxu0 %v698
    %718 = vmatprep.subr.bf16.mxu0 0
    %719 = vmatpush1.bf16.msra.mxu0 %v699
    %720 = vmatprep.subr.bf16.mxu0 0
    %721 = vmatpush1.bf16.msra.mxu0 %v700
    %722 = vmatprep.subr.bf16.mxu0 0
    %723 = vmatpush1.bf16.msra.mxu0 %v701
    %724 = vmatprep.subr.bf16.mxu0 0
    %725 = vmatpush1.bf16.msra.mxu0 %v702
    %726 = vmatprep.subr.bf16.mxu0 0
    %727 = vmatpush1.bf16.msra.mxu0 %v703
    %728 = vmatprep.subr.bf16.mxu0 0
    %729 = vmatpush1.bf16.msra.mxu0 0
    %730 = vmatprep.subr.bf16.mxu0 0
    %731 = vmatpush1.bf16.msra.mxu0 0
    %732 = vmatprep.subr.bf16.mxu0 0
    %733 = vmatpush1.bf16.msra.mxu0 0
    %734 = vmatprep.subr.bf16.mxu0 0
    %735 = vmatpush1.bf16.msra.mxu0 0
    %736 = vmatprep.subr.bf16.mxu0 0
    %737 = vmatpush1.bf16.msra.mxu0 0
    %738 = vmatprep.subr.bf16.mxu0 0
    %739 = vmatpush1.bf16.msra.mxu0 0
    %740 = vmatprep.subr.bf16.mxu0 0
    %741 = vmatpush1.bf16.msra.mxu0 0
    %742 = vmatprep.subr.bf16.mxu0 0
    %743 = vmatpush1.bf16.msra.mxu0 0
    %744 = vmatprep.mubr.bf16.mxu0 0
    %745 = vmatmul.mubr.bf16.gmra.mrb[0].mxu0 %v646
    %v746 = vpop.f32.mrb[0].mxu0
    %v747 = vadd.f32 0.0, %v746
    %v748 = vpop.f32.mrb[0].mxu0
    %v749 = vpop.f32.mrb[0].mxu0
    %v750 = vadd.f32 0.0, %v749
    %v751 = vpop.f32.mrb[0].mxu0
    %752 = vmatprep.mubr.bf16.mxu0 0
    %753 = vmatmul.mubr.bf16.gmra.mrb[0].mxu0 %v647
    %v754 = vpop.f32.mrb[0].mxu0
    %v755 = vadd.f32 0.0, %v754
    %v756 = vpop.f32.mrb[0].mxu0
    %v757 = vpop.f32.mrb[0].mxu0
    %v758 = vadd.f32 0.0, %v757
    %v759 = vpop.f32.mrb[0].mxu0
    %760 = vdwg.mxu0
    %v777 = vunpack.c.l.b16 %v581
    %v778 = vunpack.c.l.b16 %v582
    %v779 = vunpack.c.l.b16 %v583
    %v780 = vunpack.c.l.b16 %v584
    %v781 = vunpack.c.l.b16 %v585
    %v782 = vunpack.c.l.b16 %v586
    %v783 = vunpack.c.l.b16 %v587
    %v784 = vunpack.c.l.b16 %v588
    %v785 = vunpack.c.l.b16 %v589
    %v786 = vunpack.c.l.b16 %v590
    %v787 = vunpack.c.l.b16 %v591
    %v788 = vunpack.c.l.b16 %v592
    %v789 = vunpack.c.l.b16 %v593
    %v790 = vunpack.c.l.b16 %v594
    %v791 = vunpack.c.l.b16 %v595
    %v792 = vunpack.c.l.b16 %v596
    %v793 = vpack.c.b16 %v778, %v777
    %v794 = vpack.c.b16 %v780, %v779
    %v795 = vpack.c.b16 %v782, %v781
    %v796 = vpack.c.b16 %v784, %v783
    %v797 = vpack.c.b16 %v786, %v785
    %v798 = vpack.c.b16 %v788, %v787
    %v799 = vpack.c.b16 %v790, %v789
    %v800 = vpack.c.b16 %v792, %v791
    %809 = vmatprep.subr.bf16.mxu0 0
    %810 = vmatpush1.bf16.msra.mxu0 %v793
    %811 = vmatprep.subr.bf16.mxu0 0
    %812 = vmatpush1.bf16.msra.mxu0 %v794
    %813 = vmatprep.subr.bf16.mxu0 0
    %814 = vmatpush1.bf16.msra.mxu0 %v795
    %815 = vmatprep.subr.bf16.mxu0 0
    %816 = vmatpush1.bf16.msra.mxu0 %v796
    %817 = vmatprep.subr.bf16.mxu0 0
    %818 = vmatpush1.bf16.msra.mxu0 %v797
    %819 = vmatprep.subr.bf16.mxu0 0
    %820 = vmatpush1.bf16.msra.mxu0 %v798
    %821 = vmatprep.subr.bf16.mxu0 0
    %822 = vmatpush1.bf16.msra.mxu0 %v799
    %823 = vmatprep.subr.bf16.mxu0 0
    %824 = vmatpush1.bf16.msra.mxu0 %v800
    %825 = vmatprep.subr.bf16.mxu0 0
    %826 = vmatpush1.bf16.msra.mxu0 0
    %827 = vmatprep.subr.bf16.mxu0 0
    %828 = vmatpush1.bf16.msra.mxu0 0
    %829 = vmatprep.subr.bf16.mxu0 0
    %830 = vmatpush1.bf16.msra.mxu0 0
    %831 = vmatprep.subr.bf16.mxu0 0
    %832 = vmatpush1.bf16.msra.mxu0 0
    %833 = vmatprep.subr.bf16.mxu0 0
    %834 = vmatpush1.bf16.msra.mxu0 0
    %835 = vmatprep.subr.bf16.mxu0 0
    %836 = vmatpush1.bf16.msra.mxu0 0
    %837 = vmatprep.subr.bf16.mxu0 0
    %838 = vmatpush1.bf16.msra.mxu0 0
    %839 = vmatprep.subr.bf16.mxu0 0
    %840 = vmatpush1.bf16.msra.mxu0 0
    %841 = vmatprep.mubr.bf16.mxu0 0
    %842 = vmatmul.mubr.bf16.gmra.mrb[0].mxu0 %v578
    %v843 = vpop.f32.mrb[0].mxu0
    %v844 = vadd.f32 %v747, %v843
    %v845 = vpop.f32.mrb[0].mxu0
    %v846 = vpop.f32.mrb[0].mxu0
    %v847 = vadd.f32 %v750, %v846
    %v848 = vpop.f32.mrb[0].mxu0
    %849 = vmatprep.mubr.bf16.mxu0 0
    %850 = vmatmul.mubr.bf16.gmra.mrb[0].mxu0 %v579
    %v851 = vpop.f32.mrb[0].mxu0
    %v852 = vadd.f32 %v755, %v851
    %v853 = vpop.f32.mrb[0].mxu0
    %v854 = vpop.f32.mrb[0].mxu0
    %v855 = vadd.f32 %v758, %v854
    %v856 = vpop.f32.mrb[0].mxu0
    %857 = vdwg.mxu0
    %858 = vmatprep.subr.bf16.mxu0 0
    %859 = vmatpush1.bf16.msra.mxu0 %v578
    %860 = vmatprep.subr.bf16.mxu0 0
    %861 = vmatpush1.bf16.msra.mxu0 %v579
    %862 = vmatprep.subr.bf16.mxu0 0
    %863 = vmatpush1.bf16.msra.mxu0 0
    %864 = vmatprep.subr.bf16.mxu0 0
    %865 = vmatpush1.bf16.msra.mxu0 0
    %866 = vmatprep.subr.bf16.mxu0 0
    %867 = vmatpush1.bf16.msra.mxu0 0
    %868 = vmatprep.subr.bf16.mxu0 0
    %869 = vmatpush1.bf16.msra.mxu0 0
    %870 = vmatprep.subr.bf16.mxu0 0
    %871 = vmatpush1.bf16.msra.mxu0 0
    %872 = vmatprep.subr.bf16.mxu0 0
    %873 = vmatpush1.bf16.msra.mxu0 0
    %874 = vmatprep.subr.bf16.mxu0 0
    %875 = vmatpush1.bf16.msra.mxu0 0
    %876 = vmatprep.subr.bf16.mxu0 0
    %877 = vmatpush1.bf16.msra.mxu0 0
    %878 = vmatprep.subr.bf16.mxu0 0
    %879 = vmatpush1.bf16.msra.mxu0 0
    %880 = vmatprep.subr.bf16.mxu0 0
    %881 = vmatpush1.bf16.msra.mxu0 0
    %882 = vmatprep.subr.bf16.mxu0 0
    %883 = vmatpush1.bf16.msra.mxu0 0
    %884 = vmatprep.subr.bf16.mxu0 0
    %885 = vmatpush1.bf16.msra.mxu0 0
    %886 = vmatprep.subr.bf16.mxu0 0
    %887 = vmatpush1.bf16.msra.mxu0 0
    %888 = vmatprep.subr.bf16.mxu0 0
    %889 = vmatpush1.bf16.msra.mxu0 0
    %890 = vmatprep.mubr.bf16.mxu0 0
    %891 = vmatmul.mubr.bf16.gmra.mrb[0].mxu0 %v389
    %v892 = vpop.f32.mrb[0].mxu0
    %v893 = vadd.f32 0.0, %v892
    %v894 = vpop.f32.mrb[0].mxu0
    %v895 = vpop.f32.mrb[0].mxu0
    %v896 = vadd.f32 0.0, %v895
    %v897 = vpop.f32.mrb[0].mxu0
    %898 = vmatprep.mubr.bf16.mxu0 0
    %899 = vmatmul.mubr.bf16.gmra.mrb[0].mxu0 %v392
    %v900 = vpop.f32.mrb[0].mxu0
    %v901 = vadd.f32 0.0, %v900
    %v902 = vpop.f32.mrb[0].mxu0
    %v903 = vpop.f32.mrb[0].mxu0
    %v904 = vadd.f32 0.0, %v903
    %v905 = vpop.f32.mrb[0].mxu0
    %906 = vdwg.mxu0
    %v907 = vpack.c.bf16 %v896, %v893
    %v908 = vpack.c.bf16 %v904, %v901
    %s909 = scalar_lea.vmem [#allocation5], 128
    %v910 = vld [vmem:[%s909] sm:$0xf]
    %v911 = vld [vmem:[%s909 + $0x4] sm:$0xf]
    %v912 = vld [vmem:[%s909 + $0x8] sm:$0xf]
    %v913 = vld [vmem:[%s909 + $0xc] sm:$0xf]
    %v914 = vld [vmem:[%s909 + $0x10] sm:$0xf]
    %v915 = vld [vmem:[%s909 + $0x14] sm:$0xf]
    %v916 = vld [vmem:[%s909 + $0x18] sm:$0xf]
    %v917 = vld [vmem:[%s909 + $0x1c] sm:$0xf]
    %v918 = vld [vmem:[%s909 + $0x20] sm:$0xf]
    %v919 = vld [vmem:[%s909 + $0x24] sm:$0xf]
    %v920 = vld [vmem:[%s909 + $0x28] sm:$0xf]
    %v921 = vld [vmem:[%s909 + $0x2c] sm:$0xf]
    %v922 = vld [vmem:[%s909 + $0x30] sm:$0xf]
    %v923 = vld [vmem:[%s909 + $0x34] sm:$0xf]
    %v924 = vld [vmem:[%s909 + $0x38] sm:$0xf]
    %v925 = vld [vmem:[%s909 + $0x3c] sm:$0xf]
    %v942 = vunpack.c.l.b16 %v910
    %v943 = vunpack.c.l.b16 %v911
    %v944 = vunpack.c.l.b16 %v912
    %v945 = vunpack.c.l.b16 %v913
    %v946 = vunpack.c.l.b16 %v914
    %v947 = vunpack.c.l.b16 %v915
    %v948 = vunpack.c.l.b16 %v916
    %v949 = vunpack.c.l.b16 %v917
    %v950 = vunpack.c.l.b16 %v918
    %v951 = vunpack.c.l.b16 %v919
    %v952 = vunpack.c.l.b16 %v920
    %v953 = vunpack.c.l.b16 %v921
    %v954 = vunpack.c.l.b16 %v922
    %v955 = vunpack.c.l.b16 %v923
    %v956 = vunpack.c.l.b16 %v924
    %v957 = vunpack.c.l.b16 %v925
    %v958 = vpack.c.b16 %v943, %v942
    %v959 = vpack.c.b16 %v945, %v944
    %v960 = vpack.c.b16 %v947, %v946
    %v961 = vpack.c.b16 %v949, %v948
    %v962 = vpack.c.b16 %v951, %v950
    %v963 = vpack.c.b16 %v953, %v952
    %v964 = vpack.c.b16 %v955, %v954
    %v965 = vpack.c.b16 %v957, %v956
    %974 = vmatprep.subr.bf16.mxu0 0
    %975 = vmatpush1.bf16.msra.mxu0 %v958
    %976 = vmatprep.subr.bf16.mxu0 0
    %977 = vmatpush1.bf16.msra.mxu0 %v959
    %978 = vmatprep.subr.bf16.mxu0 0
    %979 = vmatpush1.bf16.msra.mxu0 %v960
    %980 = vmatprep.subr.bf16.mxu0 0
    %981 = vmatpush1.bf16.msra.mxu0 %v961
    %982 = vmatprep.subr.bf16.mxu0 0
    %983 = vmatpush1.bf16.msra.mxu0 %v962
    %984 = vmatprep.subr.bf16.mxu0 0
    %985 = vmatpush1.bf16.msra.mxu0 %v963
    %986 = vmatprep.subr.bf16.mxu0 0
    %987 = vmatpush1.bf16.msra.mxu0 %v964
    %988 = vmatprep.subr.bf16.mxu0 0
    %989 = vmatpush1.bf16.msra.mxu0 %v965
    %990 = vmatprep.subr.bf16.mxu0 0
    %991 = vmatpush1.bf16.msra.mxu0 0
    %992 = vmatprep.subr.bf16.mxu0 0
    %993 = vmatpush1.bf16.msra.mxu0 0
    %994 = vmatprep.subr.bf16.mxu0 0
    %995 = vmatpush1.bf16.msra.mxu0 0
    %996 = vmatprep.subr.bf16.mxu0 0
    %997 = vmatpush1.bf16.msra.mxu0 0
    %998 = vmatprep.subr.bf16.mxu0 0
    %999 = vmatpush1.bf16.msra.mxu0 0
    %1000 = vmatprep.subr.bf16.mxu0 0
    %1001 = vmatpush1.bf16.msra.mxu0 0
    %1002 = vmatprep.subr.bf16.mxu0 0
    %1003 = vmatpush1.bf16.msra.mxu0 0
    %1004 = vmatprep.subr.bf16.mxu0 0
    %1005 = vmatpush1.bf16.msra.mxu0 0
    %1006 = vmatprep.mubr.bf16.mxu0 0
    %1007 = vmatmul.mubr.bf16.gmra.mrb[0].mxu0 %v907
    %v1008 = vpop.f32.mrb[0].mxu0
    %v1009 = vadd.f32 0.0, %v1008
    %v1010 = vpop.f32.mrb[0].mxu0
    %v1011 = vpop.f32.mrb[0].mxu0
    %v1012 = vadd.f32 0.0, %v1011
    %v1013 = vpop.f32.mrb[0].mxu0
    %1014 = vmatprep.mubr.bf16.mxu0 0
    %1015 = vmatmul.mubr.bf16.gmra.mrb[0].mxu0 %v908
    %v1016 = vpop.f32.mrb[0].mxu0
    %v1017 = vadd.f32 0.0, %v1016
    %v1018 = vpop.f32.mrb[0].mxu0
    %v1019 = vpop.f32.mrb[0].mxu0
    %v1020 = vadd.f32 0.0, %v1019
    %v1021 = vpop.f32.mrb[0].mxu0
    %1022 = vdwg.mxu0
    %v1023 = vadd.f32 %v844, %v1009
    %v1024 = vadd.f32 %v847, %v1012
    %v1025 = vadd.f32 %v852, %v1017
    %v1026 = vadd.f32 %v855, %v1020
    %v1027 = vld [vmem:[%s5] sm:$0x1]
    %v1029 = vlaneseq
    %v1030 = vshrl.u32 %v1029, 7
    %v1031 = vsub.s32 0, %v1030
    %v1032 = vrot.slane %v1027, %v1031
    %v1034 = vadd.f32 %v1023, %v1032
    %v1035 = vadd.f32 %v1024, %v1032
    %v1036 = vadd.f32 %v1025, %v1032
    %v1037 = vadd.f32 %v1026, %v1032
    %v1038 = vld [vmem:[%s6] sm:$0x3]
    %v1040 = vsel %vm105, %v1038, 0
    %1042 = vmatprep.subr.mxu0 0.0
    %1043 = vmatpush1.msra.mxu0 %v1034
    %1044 = vmatprep.subr.mxu0 0.0
    %1045 = vmatpush1.msra.mxu0 %v1035
    %1046 = vmatprep.subr.mxu0 0.0
    %1047 = vmatpush1.msra.mxu0 %v1036
    %1048 = vmatprep.subr.mxu0 0.0
    %1049 = vmatpush1.msra.mxu0 %v1037
    %1050 = vmatprep.subr.mxu0 0.0
    %1051 = vmatpush1.msra.mxu0 0.0
    %1052 = vmatprep.subr.mxu0 0.0
    %1053 = vmatpush1.msra.mxu0 0.0
    %1054 = vmatprep.subr.mxu0 0.0
    %1055 = vmatpush1.msra.mxu0 0.0
    %1056 = vmatprep.subr.mxu0 0.0
    %1057 = vmatpush1.msra.mxu0 0.0
    %1058 = vmatprep.subr.mxu0 0.0
    %1059 = vmatpush1.msra.mxu0 0.0
    %1060 = vmatprep.subr.mxu0 0.0
    %1061 = vmatpush1.msra.mxu0 0.0
    %1062 = vmatprep.subr.mxu0 0.0
    %1063 = vmatpush1.msra.mxu0 0.0
    %1064 = vmatprep.subr.mxu0 0.0
    %1065 = vmatpush1.msra.mxu0 0.0
    %1066 = vmatprep.subr.mxu0 0.0
    %1067 = vmatpush1.msra.mxu0 0.0
    %1068 = vmatprep.subr.mxu0 0.0
    %1069 = vmatpush1.msra.mxu0 0.0
    %1070 = vmatprep.subr.mxu0 0.0
    %1071 = vmatpush1.msra.mxu0 0.0
    %1072 = vmatprep.subr.mxu0 0.0
    %1073 = vmatpush1.msra.mxu0 0.0
    %1074 = vmatprep.subr.mxu0 0.0
    %1075 = vmatpush1.msra.mxu0 0.0
    %1076 = vmatprep.subr.mxu0 0.0
    %1077 = vmatpush1.msra.mxu0 0.0
    %1078 = vmatprep.subr.mxu0 0.0
    %1079 = vmatpush1.msra.mxu0 0.0
    %1080 = vmatprep.subr.mxu0 0.0
    %1081 = vmatpush1.msra.mxu0 0.0
    %1082 = vmatprep.subr.mxu0 0.0
    %1083 = vmatpush1.msra.mxu0 0.0
    %1084 = vmatprep.subr.mxu0 0.0
    %1085 = vmatpush1.msra.mxu0 0.0
    %1086 = vmatprep.subr.mxu0 0.0
    %1087 = vmatpush1.msra.mxu0 0.0
    %1088 = vmatprep.subr.mxu0 0.0
    %1089 = vmatpush1.msra.mxu0 0.0
    %1090 = vmatprep.subr.mxu0 0.0
    %1091 = vmatpush1.msra.mxu0 0.0
    %1092 = vmatprep.subr.mxu0 0.0
    %1093 = vmatpush1.msra.mxu0 0.0
    %1094 = vmatprep.subr.mxu0 0.0
    %1095 = vmatpush1.msra.mxu0 0.0
    %1096 = vmatprep.subr.mxu0 0.0
    %1097 = vmatpush1.msra.mxu0 0.0
    %1098 = vmatprep.subr.mxu0 0.0
    %1099 = vmatpush1.msra.mxu0 0.0
    %1100 = vmatprep.subr.mxu0 0.0
    %1101 = vmatpush1.msra.mxu0 0.0
    %1102 = vmatprep.subr.mxu0 0.0
    %1103 = vmatpush1.msra.mxu0 0.0
    %1104 = vmatprep.subr.mxu0 0.0
    %1105 = vmatpush1.msra.mxu0 0.0
    %1106 = vmatprep.mubr.f32.mxu0 0.0
    %1107 = vmatmul.mubr.f32.gmra.mrb[0].mxu0 %v1040
    %v1108 = vpop.f32.mrb[0].mxu0
    %v1109 = vadd.f32 0.0, %v1108
    %v1110 = vpop.f32.mrb[0].mxu0
    %1111 = vdwg.mxu0
    %v1112 = vld [vmem:[%s7] sm:$0xff]
    %v1113 = vld [vmem:[%s7 + $0x8] sm:$0xff]
    %v1114 = vld [vmem:[%s7 + $0x10] sm:$0xff]
    %v1115 = vld [vmem:[%s7 + $0x18] sm:$0xff]
    %v1116 = vld [vmem:[%s7 + $0x20] sm:$0xff]
    %v1117 = vld [vmem:[%s7 + $0x28] sm:$0xff]
    %v1118 = vld [vmem:[%s7 + $0x30] sm:$0xff]
    %v1119 = vld [vmem:[%s7 + $0x38] sm:$0xff]
    %v1120 = vld [vmem:[%s7 + $0x40] sm:$0xff]
    %v1121 = vld [vmem:[%s7 + $0x48] sm:$0xff]
    %v1122 = vld [vmem:[%s7 + $0x50] sm:$0xff]
    %v1123 = vld [vmem:[%s7 + $0x58] sm:$0xff]
    %v1124 = vld [vmem:[%s7 + $0x60] sm:$0xff]
    %v1125 = vld [vmem:[%s7 + $0x68] sm:$0xff]
    %v1126 = vld [vmem:[%s7 + $0x70] sm:$0xff]
    %v1127 = vld [vmem:[%s7 + $0x78] sm:$0xff]
    %v1128 = vld [vmem:[%s8] sm:$0x1]
    %v1130 = vlaneseq
    %v1131 = vshrl.u32 %v1130, 7
    %v1132 = vsub.s32 0, %v1131
    %v1133 = vrot.slane %v1128, %v1132
    %1135 = vmatprep.subr.mxu0 0.0
    %1136 = vmatpush1.msra.mxu0 %v1112
    %1137 = vmatprep.subr.mxu0 0.0
    %1138 = vmatpush1.msra.mxu0 %v1113
    %1139 = vmatprep.subr.mxu0 0.0
    %1140 = vmatpush1.msra.mxu0 %v1114
    %1141 = vmatprep.subr.mxu0 0.0
    %1142 = vmatpush1.msra.mxu0 %v1115
    %1143 = vmatprep.subr.mxu0 0.0
    %1144 = vmatpush1.msra.mxu0 %v1116
    %1145 = vmatprep.subr.mxu0 0.0
    %1146 = vmatpush1.msra.mxu0 %v1117
    %1147 = vmatprep.subr.mxu0 0.0
    %1148 = vmatpush1.msra.mxu0 %v1118
    %1149 = vmatprep.subr.mxu0 0.0
    %1150 = vmatpush1.msra.mxu0 %v1119
    %1151 = vmatprep.subr.mxu0 0.0
    %1152 = vmatpush1.msra.mxu0 %v1120
    %1153 = vmatprep.subr.mxu0 0.0
    %1154 = vmatpush1.msra.mxu0 %v1121
    %1155 = vmatprep.subr.mxu0 0.0
    %1156 = vmatpush1.msra.mxu0 %v1122
    %1157 = vmatprep.subr.mxu0 0.0
    %1158 = vmatpush1.msra.mxu0 %v1123
    %1159 = vmatprep.subr.mxu0 0.0
    %1160 = vmatpush1.msra.mxu0 %v1124
    %1161 = vmatprep.subr.mxu0 0.0
    %1162 = vmatpush1.msra.mxu0 %v1125
    %1163 = vmatprep.subr.mxu0 0.0
    %1164 = vmatpush1.msra.mxu0 %v1126
    %1165 = vmatprep.subr.mxu0 0.0
    %1166 = vmatpush1.msra.mxu0 %v1127
    %1167 = vmatprep.subr.mxu0 0.0
    %1168 = vmatpush1.msra.mxu0 0.0
    %1169 = vmatprep.subr.mxu0 0.0
    %1170 = vmatpush1.msra.mxu0 0.0
    %1171 = vmatprep.subr.mxu0 0.0
    %1172 = vmatpush1.msra.mxu0 0.0
    %1173 = vmatprep.subr.mxu0 0.0
    %1174 = vmatpush1.msra.mxu0 0.0
    %1175 = vmatprep.subr.mxu0 0.0
    %1176 = vmatpush1.msra.mxu0 0.0
    %1177 = vmatprep.subr.mxu0 0.0
    %1178 = vmatpush1.msra.mxu0 0.0
    %1179 = vmatprep.subr.mxu0 0.0
    %1180 = vmatpush1.msra.mxu0 0.0
    %1181 = vmatprep.subr.mxu0 0.0
    %1182 = vmatpush1.msra.mxu0 0.0
    %1183 = vmatprep.subr.mxu0 0.0
    %1184 = vmatpush1.msra.mxu0 0.0
    %1185 = vmatprep.subr.mxu0 0.0
    %1186 = vmatpush1.msra.mxu0 0.0
    %1187 = vmatprep.subr.mxu0 0.0
    %1188 = vmatpush1.msra.mxu0 0.0
    %1189 = vmatprep.subr.mxu0 0.0
    %1190 = vmatpush1.msra.mxu0 0.0
    %1191 = vmatprep.subr.mxu0 0.0
    %1192 = vmatpush1.msra.mxu0 0.0
    %1193 = vmatprep.subr.mxu0 0.0
    %1194 = vmatpush1.msra.mxu0 0.0
    %1195 = vmatprep.subr.mxu0 0.0
    %1196 = vmatpush1.msra.mxu0 0.0
    %1197 = vmatprep.subr.mxu0 0.0
    %1198 = vmatpush1.msra.mxu0 0.0
    %1199 = vmatprep.mubr.f32.mxu0 0.0
    %1200 = vmatmul.mubr.f32.gmra.mrb[0].mxu0 %v1109
    %v1201 = vpop.f32.mrb[0].mxu0
    %v1202 = vadd.f32 %v1133, %v1201
    %v1203 = vpop.f32.mrb[0].mxu0
    %1204 = vdwg.mxu0
    %v1205 = vmax.f32 %v1202, 0.0
    %v1206 = vld [vmem:[%s9] sm:$0xf]
    %v1207 = vld [vmem:[%s10] sm:$0x1]
    %v1209 = vlaneseq
    %v1210 = vshrl.u32 %v1209, 7
    %v1211 = vsub.s32 0, %v1210
    %v1212 = vrot.slane %v1207, %v1211
    %vm1214 = vcmask 31744
    %v1216 = vsel %vm1214, %v1205, 0
    %vm1218 = vcmask 1043456
    %v1220 = vsel %vm1218, %v1206, 0
    %1222 = vmatprep.subr.mxu0 0.0
    %1223 = vmatpush1.msra.mxu0 %v1220
    %1224 = vmatprep.subr.mxu0 0.0
    %1225 = vmatpush1.msra.mxu0 0.0
    %1226 = vmatprep.subr.mxu0 0.0
    %1227 = vmatpush1.msra.mxu0 0.0
    %1228 = vmatprep.subr.mxu0 0.0
    %1229 = vmatpush1.msra.mxu0 0.0
    %1230 = vmatprep.subr.mxu0 0.0
    %1231 = vmatpush1.msra.mxu0 0.0
    %1232 = vmatprep.subr.mxu0 0.0
    %1233 = vmatpush1.msra.mxu0 0.0
    %1234 = vmatprep.subr.mxu0 0.0
    %1235 = vmatpush1.msra.mxu0 0.0
    %1236 = vmatprep.subr.mxu0 0.0
    %1237 = vmatpush1.msra.mxu0 0.0
    %1238 = vmatprep.subr.mxu0 0.0
    %1239 = vmatpush1.msra.mxu0 0.0
    %1240 = vmatprep.subr.mxu0 0.0
    %1241 = vmatpush1.msra.mxu0 0.0
    %1242 = vmatprep.subr.mxu0 0.0
    %1243 = vmatpush1.msra.mxu0 0.0
    %1244 = vmatprep.subr.mxu0 0.0
    %1245 = vmatpush1.msra.mxu0 0.0
    %1246 = vmatprep.subr.mxu0 0.0
    %1247 = vmatpush1.msra.mxu0 0.0
    %1248 = vmatprep.subr.mxu0 0.0
    %1249 = vmatpush1.msra.mxu0 0.0
    %1250 = vmatprep.subr.mxu0 0.0
    %1251 = vmatpush1.msra.mxu0 0.0
    %1252 = vmatprep.subr.mxu0 0.0
    %1253 = vmatpush1.msra.mxu0 0.0
    %1254 = vmatprep.subr.mxu0 0.0
    %1255 = vmatpush1.msra.mxu0 0.0
    %1256 = vmatprep.subr.mxu0 0.0
    %1257 = vmatpush1.msra.mxu0 0.0
    %1258 = vmatprep.subr.mxu0 0.0
    %1259 = vmatpush1.msra.mxu0 0.0
    %1260 = vmatprep.subr.mxu0 0.0
    %1261 = vmatpush1.msra.mxu0 0.0
    %1262 = vmatprep.subr.mxu0 0.0
    %1263 = vmatpush1.msra.mxu0 0.0
    %1264 = vmatprep.subr.mxu0 0.0
    %1265 = vmatpush1.msra.mxu0 0.0
    %1266 = vmatprep.subr.mxu0 0.0
    %1267 = vmatpush1.msra.mxu0 0.0
    %1268 = vmatprep.subr.mxu0 0.0
    %1269 = vmatpush1.msra.mxu0 0.0
    %1270 = vmatprep.subr.mxu0 0.0
    %1271 = vmatpush1.msra.mxu0 0.0
    %1272 = vmatprep.subr.mxu0 0.0
    %1273 = vmatpush1.msra.mxu0 0.0
    %1274 = vmatprep.subr.mxu0 0.0
    %1275 = vmatpush1.msra.mxu0 0.0
    %1276 = vmatprep.subr.mxu0 0.0
    %1277 = vmatpush1.msra.mxu0 0.0
    %1278 = vmatprep.subr.mxu0 0.0
    %1279 = vmatpush1.msra.mxu0 0.0
    %1280 = vmatprep.subr.mxu0 0.0
    %1281 = vmatpush1.msra.mxu0 0.0
    %1282 = vmatprep.subr.mxu0 0.0
    %1283 = vmatpush1.msra.mxu0 0.0
    %1284 = vmatprep.subr.mxu0 0.0
    %1285 = vmatpush1.msra.mxu0 0.0
    %1286 = vmatprep.mubr.f32.mxu0 0.0
    %1287 = vmatmul.mubr.f32.gmra.mrb[0].mxu0 %v1216
    %v1288 = vpop.f32.mrb[0].mxu0
    %v1289 = vadd.f32 %v1212, %v1288
    %v1290 = vpop.f32.mrb[0].mxu0
    %1291 = vdwg.mxu0
    %v1292 = vxor.u32 %v1289, 2147483648
    %v1293 = vmul.f32 %v1292, 1.442695
    %v1294 = vpow.pop %v1293
    %v1295 = vadd.f32 %v1294, 1.0
    %v1296 = vrcp.pop %v1295
    %v1297 = vmul.f32 1.0, %v1296
    %v1300 = vunpack.c.l.s4 1966171168
    %v1301 = vunpack.c.0.s8 %v1300
    %v1302 = vlaneseq
    %v1303 = vshrl.u32 %v1302, 7
    %v1304 = vsub.s32 %v1301, %v1303
    %v1305 = vrot.slane %v1297, %v1304
    %v1306 = vcombine.high %v1305, %v1305
    %v1308 = vunpack.c.l.s4 1966171168
    %v1309 = vunpack.c.0.s8 %v1308
    %v1310 = vlaneseq
    %v1311 = vshrl.u32 %v1310, 7
    %v1312 = vsub.s32 %v1309, %v1311
    %v1313 = vrot.slane %v1305, %v1312
    %v1315 = vunpack.c.l.s4 1966171168
    %v1316 = vunpack.c.0.s8 %v1315
    %v1317 = vlaneseq
    %v1318 = vshrl.u32 %v1317, 7
    %v1319 = vsub.s32 %v1316, %v1318
    %v1320 = vrot.slane %v1306, %v1319
    %v1321 = vlaneseq
    %v1322 = vshrl.u32 %v1321, 7
    %v1323 = vsub.s32 0, %v1322
    %v1324 = vrot.slane %v1313, %v1323
    %v1325 = vlaneseq
    %v1326 = vshrl.u32 %v1325, 7
    %v1327 = vsub.s32 0, %v1326
    %v1328 = vrot.slane %v1320, %v1327
    %v1331 = vmul.f32 %v1034, %v1324
    %v1332 = vmul.f32 %v1035, %v1324
    %v1333 = vmul.f32 %v1036, %v1328
    %v1334 = vmul.f32 %v1037, %v1328
    %v1335 = vadd.f32 %v1331, %v68
    %v1336 = vadd.f32 %v1332, %v69
    %v1337 = vadd.f32 %v1333, %v70
    %v1338 = vadd.f32 %v1334, %v71
    %1339 = vst [vmem:[#allocation7] sm:$0xff] %v1335
    %1340 = vst [vmem:[#allocation7 + $0x8] sm:$0xff] %v1336
    %1341 = vst [vmem:[#allocation7 + $0x10] sm:$0xff] %v1337
    %1342 = vst [vmem:[#allocation7 + $0x18] sm:$0xff] %v1338
    // Predicated region
    $region54: #{tpu_custom_call.1} parent=1 // pred_check
      _
    $region55: #{tpu_custom_call.1} parent=1 // pred_check_branch
      %1344 = sbr.rel (0) target = $region57
    $region56: #{tpu_custom_call.1} parent=1 // pred_region
      %s1346 = ssub.s32 512, 512
      %1347 = vsyncadd [#allocation4], %s1346
      %s1348 = sshll.u32 [#allocation7], 4
      %s1349 = int_to_ptr.vmem [resolvable:$true] %s1348
      %1354 = dma.vmem_to_hbm [thread:$0]  %s1349, 512, %s11, [#allocation4], 128, 128, 8
    $region57: #{tpu_custom_call.1} parent=1 // pred_fallthru
      _
    // Predicated region
    $region58: #{tpu_custom_call.1} parent=1 // pred_check
      _
    $region59: #{tpu_custom_call.1} parent=1 // pred_check_branch
      %1356 = sbr.rel (0) target = $region61
    $region60: #{tpu_custom_call.1} parent=1 // pred_region
      %1357 = dma.done [#allocation4], 512
    $region61: #{tpu_custom_call.1} parent=1 // pred_fallthru
      _
    %1358 = vsyncpa [#allocation3], 1
    %1359 = vsyncpa [#allocation6], 1
    %1360 = vsyncpa [#allocation4], 1

</llo_original>
